<compile_context>
chip_gen: v7x
topology: tpu7x:2x2x1
jax: 0.10.0
libtpu: 0.0.40
codegen_flags: <defaults>
</compile_context>

<pallas_src>
import functools

import jax
import jax.numpy as jnp
import numpy as np
from jax import lax
from jax.experimental import pallas as pl
from jax.experimental.pallas import tpu as pltpu

K = 3      # conv kernel size ("same" padding)
LANE = 128  # lane width for lane-dense classifier output


def cnn_kernel(x_ref, w1_ref, b1_ref, w2_ref, b2_ref, pool_ref, wfc_ref,
               bfc_ref, o_ref, *, seq_len):
    # x_ref   : (TS*L, Cin) f32  channels-last rows for TS whole samples
    # w1_ref  : (K, Cin, H) bf16 conv1 weights, tap-major leading axis
    # b1_ref  : (1, H)      f32
    # w2_ref  : (K, H, P)   bf16 conv2 weights
    # b2_ref  : (1, P)      f32
    # pool_ref: (TS, TS*L)  bf16 0/1 per-sample segment matrix (same every tile)
    # wfc_ref : (P, Cpad)   bf16 classifier, zero-padded to lane-dense Cpad
    # bfc_ref : (1, Cpad)   f32
    # o_ref   : (TS, Cpad)  f32 logits block for this tile's samples
    rows = x_ref.shape[0]
    L = seq_len

    row = lax.broadcasted_iota(jnp.int32, (rows, 1), 0)
    pos = row % L                     # position of each row within its sample
    not_first = pos != 0              # tap at offset -1 is in-range
    not_last = pos != (L - 1)         # tap at offset +1 is in-range

    def conv_same_relu(y, w_ref, b_ref):
        # "same" conv as three accumulated MXU dots (one per tap).  Taps are
        # sublane rolls (XLU) with per-sample boundary rows zeroed (implicit
        # zero padding); roll wrap-around across sample edges inside the tile
        # is exactly the masked region, so whole-sample tiles stay correct.
        left = jnp.where(not_first, pltpu.roll(y, shift=1, axis=0), 0.0)
        right = jnp.where(not_last, pltpu.roll(y, shift=rows - 1, axis=0), 0.0)
        acc = jnp.dot(y.astype(jnp.bfloat16), w_ref[1],
                      preferred_element_type=jnp.float32)
        acc += jnp.dot(left.astype(jnp.bfloat16), w_ref[0],
                       preferred_element_type=jnp.float32)
        acc += jnp.dot(right.astype(jnp.bfloat16), w_ref[2],
                       preferred_element_type=jnp.float32)
        return jnp.maximum(acc + b_ref[...], 0.0)     # f32 bias + ReLU

    x = x_ref[...]                                    # (rows, Cin) f32
    y1 = conv_same_relu(x, w1_ref, b1_ref)            # (rows, H)   f32
    y2 = conv_same_relu(y1, w2_ref, b2_ref)           # (rows, P)   f32

    # Per-sample global average pool: tiny 0/1 segment matmul on the MXU,
    # exact 1/L scaling applied in f32 (no bf16 rounding of 1/L).
    gap = jnp.dot(pool_ref[...], y2.astype(jnp.bfloat16),
                  preferred_element_type=jnp.float32) * (1.0 / L)   # (TS, P)

    # Classifier into a lane-dense Cpad-wide block (unmasked store).
    logits = jnp.dot(gap.astype(jnp.bfloat16), wfc_ref[...],
                     preferred_element_type=jnp.float32)
    o_ref[...] = logits + bfc_ref[...]


def prototype_cnn_forward(x_ncw, params, *, samples_per_tile=8):
    """x_ncw: (B, n_var, L) float32 in PyTorch NCW layout."""
    w1, b1, w2, b2, wfc, bfc = params
    B, Cin, L = x_ncw.shape
    H = w1.shape[2]
    P = w2.shape[2]
    C = wfc.shape[1]
    Cpad = ((C + LANE - 1) // LANE) * LANE

    TS = min(samples_per_tile, B)          # whole samples per grid step
    assert B % TS == 0, "batch must be divisible by samples_per_tile"
    assert (TS * L) % 8 == 0 and L >= 2, "need >=8 rows/tile and L >= 2"
    rows = TS * L
    grid = (B // TS,)

    # NCW -> channels-last row slab (B*L, Cin).  Runs inside the jit that wraps
    # this function, so in a full model XLA folds it into the producer.
    x2d = jnp.transpose(x_ncw, (0, 2, 1)).reshape(B * L, Cin)

    # bf16 MXU operands (weights); biases stay f32 for the VPU epilogues.
    w1b = w1.astype(jnp.bfloat16)                     # (K, Cin, H)
    w2b = w2.astype(jnp.bfloat16)                     # (K, H, P)
    wfcp = jnp.zeros((P, Cpad), jnp.bfloat16).at[:, :C].set(
        wfc.astype(jnp.bfloat16))
    bfcp = jnp.zeros((1, Cpad), jnp.float32).at[:, :C].set(bfc)

    # 0/1 per-sample segment matrix for one tile (identical for every tile, so
    # it stays VMEM resident via a constant index_map).
    pool = (jnp.arange(TS)[:, None] == (jnp.arange(rows)[None, :] // L)
            ).astype(jnp.bfloat16)                    # (TS, rows)

    const2 = lambda i: (0, 0)
    const3 = lambda i: (0, 0, 0)
    out = pl.pallas_call(
        functools.partial(cnn_kernel, seq_len=L),
        grid=grid,
        out_shape=jax.ShapeDtypeStruct((B, Cpad), jnp.float32),
        in_specs=[
            pl.BlockSpec((rows, Cin), lambda i: (i, 0)),   # streamed activations
            pl.BlockSpec((K, Cin, H), const3),             # resident weights
            pl.BlockSpec((1, H), const2),
            pl.BlockSpec((K, H, P), const3),
            pl.BlockSpec((1, P), const2),
            pl.BlockSpec((TS, rows), const2),
            pl.BlockSpec((P, Cpad), const2),
            pl.BlockSpec((1, Cpad), const2),
        ],
        out_specs=pl.BlockSpec((TS, Cpad), lambda i: (i, 0)),
        compiler_params=pltpu.CompilerParams(
            dimension_semantics=("parallel",)),
    )(x2d, w1b, b1, w2b, b2, pool, wfcp, bfcp)
    return out[:, :C]                                   # (B, C)


# ---------------------- pure-JAX f32 reference ----------------------
def _conv1d_same(x_blc, w_kio, bias):
    y = lax.conv_general_dilated(
        x_blc, w_kio, window_strides=(1,), padding="SAME",
        dimension_numbers=("NWC", "WIO", "NWC"))
    return y + bias


def reference_forward(x_ncw, params):
    w1, b1, w2, b2, wfc, bfc = params
    x = jnp.transpose(x_ncw, (0, 2, 1))
    y1 = jax.nn.relu(_conv1d_same(x, w1, b1))
    y2 = jax.nn.relu(_conv1d_same(y1, w2, b2))
    gap = jnp.mean(y2, axis=1)                 # (B, P)
    return gap @ wfc + bfc                     # (B, C)


if __name__ == "__main__":
    # PrototypeCNN(num_prototypes, n_var, num_classes)
    num_prototypes, n_var, num_classes = 16, 4, 8
    hidden = 32
    B, L = 16, 16          # 16 samples -> grid of 2 tiles of 8 samples each

    key = jax.random.PRNGKey(0)
    kx, k1, k2, k3 = jax.random.split(key, 4)

    x = jax.random.normal(kx, (B, n_var, L), jnp.float32)
    w1 = jax.random.normal(k1, (K, n_var, hidden), jnp.float32) * 0.1
    b1 = jnp.linspace(-0.1, 0.1, hidden, dtype=jnp.float32).reshape(1, hidden)
    w2 = jax.random.normal(k2, (K, hidden, num_prototypes), jnp.float32) * 0.1
    b2 = jnp.linspace(-0.05, 0.05, num_prototypes,
                      dtype=jnp.float32).reshape(1, num_prototypes)
    wfc = jax.random.normal(k3, (num_prototypes, num_classes), jnp.float32) * 0.1
    bfc = jnp.linspace(-0.02, 0.02, num_classes,
                       dtype=jnp.float32).reshape(1, num_classes)
    params = (w1, b1, w2, b2, wfc, bfc)

    fwd = jax.jit(prototype_cnn_forward, static_argnames=("samples_per_tile",))
    out = fwd(x, params, samples_per_tile=8)
    out = jax.block_until_ready(out)

    ref = reference_forward(x, params)
    # bf16 MXU operands vs f32 reference -> relaxed tolerance (was 1e-4 in f32).
    np.testing.assert_allclose(np.asarray(out), np.asarray(ref),
                               rtol=2e-2, atol=2e-2)
    print("KERNEL_OK")
</pallas_src>

<mosaic_0001>
module attributes {stable_mosaic.version = 11 : i64} {
  func.func @cnn_kernel(%arg0: i32, %arg1: memref<128x4xf32, #tpu.memory_space<vmem>>, %arg2: memref<3x4x32xbf16, #tpu.memory_space<vmem>>, %arg3: memref<1x32xf32, #tpu.memory_space<vmem>>, %arg4: memref<3x32x16xbf16, #tpu.memory_space<vmem>>, %arg5: memref<1x16xf32, #tpu.memory_space<vmem>>, %arg6: memref<8x128xbf16, #tpu.memory_space<vmem>>, %arg7: memref<16x128xbf16, #tpu.memory_space<vmem>>, %arg8: memref<1x128xf32, #tpu.memory_space<vmem>>, %arg9: memref<8x128xf32, #tpu.memory_space<vmem>>) attributes {dimension_semantics = [#tpu.dimension_semantics<parallel>], iteration_bounds = array<i64: 2>, scalar_prefetch = 0 : i64, scratch_operands = 0 : i64, tpu.core_type = #tpu.core_type<tc>, window_params = [{transform_indices = @transform_0, window_bounds = array<i64: 128, 4>}, {pipeline_mode = #tpu.pipeline_mode<synchronous>, transform_indices = @transform_1, window_bounds = array<i64: 3, 4, 32>}, {pipeline_mode = #tpu.pipeline_mode<synchronous>, transform_indices = @transform_2, window_bounds = array<i64: 1, 32>}, {pipeline_mode = #tpu.pipeline_mode<synchronous>, transform_indices = @transform_3, window_bounds = array<i64: 3, 32, 16>}, {pipeline_mode = #tpu.pipeline_mode<synchronous>, transform_indices = @transform_4, window_bounds = array<i64: 1, 16>}, {pipeline_mode = #tpu.pipeline_mode<synchronous>, transform_indices = @transform_5, window_bounds = array<i64: 8, 128>}, {pipeline_mode = #tpu.pipeline_mode<synchronous>, transform_indices = @transform_6, window_bounds = array<i64: 16, 128>}, {pipeline_mode = #tpu.pipeline_mode<synchronous>, transform_indices = @transform_7, window_bounds = array<i64: 1, 128>}, {transform_indices = @transform_8, window_bounds = array<i64: 8, 128>}]} {
    %0 = tpu.iota {dimensions = array<i32: 0>} : vector<128x1xi32>
    %c16_i32 = arith.constant 16 : i32
    %c0_i32 = arith.constant 0 : i32
    %1 = arith.cmpi eq, %c16_i32, %c0_i32 : i32
    %c1_i32 = arith.constant 1 : i32
    %2 = arith.select %1, %c1_i32, %c16_i32 : i32
    %3 = vector.broadcast %2 : i32 to vector<128x1xi32>
    %4 = arith.remsi %0, %3 : vector<128x1xi32>
    %c0_i32_0 = arith.constant 0 : i32
    %5 = vector.broadcast %c0_i32_0 : i32 to vector<128x1xi32>
    %6 = arith.cmpi ne, %4, %5 : vector<128x1xi32>
    %c0_i32_1 = arith.constant 0 : i32
    %7 = vector.broadcast %c0_i32_1 : i32 to vector<128x1xi32>
    %8 = arith.cmpi slt, %4, %7 : vector<128x1xi32>
    %c0_i32_2 = arith.constant 0 : i32
    %9 = arith.cmpi slt, %2, %c0_i32_2 : i32
    %10 = vector.broadcast %9 : i1 to vector<128x1xi1>
    %11 = vector.broadcast %10 : vector<128x1xi1> to vector<128x1xi1>
    %12 = arith.xori %8, %11 : vector<128x1xi1>
    %13 = arith.andi %12, %6 : vector<128x1xi1>
    %14 = vector.broadcast %2 : i32 to vector<128x1xi32>
    %15 = arith.addi %4, %14 : vector<128x1xi32>
    %16 = arith.select %13, %15, %4 : vector<128x1xi1>, vector<128x1xi32>
    %c0_i32_3 = arith.constant 0 : i32
    %17 = vector.broadcast %c0_i32_3 : i32 to vector<128x1xi32>
    %18 = arith.cmpi ne, %16, %17 : vector<128x1xi32>
    %c15_i32 = arith.constant 15 : i32
    %19 = vector.broadcast %c15_i32 : i32 to vector<128x1xi32>
    %20 = arith.cmpi ne, %16, %19 : vector<128x1xi32>
    %c0 = arith.constant 0 : index
    %c0_4 = arith.constant 0 : index
    %21 = vector.load %arg1[%c0, %c0_4] : memref<128x4xf32, #tpu.memory_space<vmem>>, vector<128x4xf32>
    %c1_i32_5 = arith.constant 1 : i32
    %22 = tpu.dynamic_rotate %21 by %c1_i32_5 dim 0 : vector<128x4xf32>, i32 -> vector<128x4xf32>
    %cst = arith.constant 0.000000e+00 : f32
    %23 = vector.shape_cast %18 : vector<128x1xi1> to vector<128x1xi1>
    %24 = vector.broadcast %23 : vector<128x1xi1> to vector<128x4xi1>
    %25 = vector.broadcast %cst : f32 to vector<128x4xf32>
    %26 = arith.select %24, %22, %25 : vector<128x4xi1>, vector<128x4xf32>
    %c127_i32 = arith.constant 127 : i32
    %27 = tpu.dynamic_rotate %21 by %c127_i32 dim 0 : vector<128x4xf32>, i32 -> vector<128x4xf32>
    %cst_6 = arith.constant 0.000000e+00 : f32
    %28 = vector.shape_cast %20 : vector<128x1xi1> to vector<128x1xi1>
    %29 = vector.broadcast %28 : vector<128x1xi1> to vector<128x4xi1>
    %30 = vector.broadcast %cst_6 : f32 to vector<128x4xf32>
    %31 = arith.select %29, %27, %30 : vector<128x4xi1>, vector<128x4xf32>
    %32 = arith.truncf %21 : vector<128x4xf32> to vector<128x4xbf16>
    %c1 = arith.constant 1 : index
    %c0_7 = arith.constant 0 : index
    %c0_8 = arith.constant 0 : index
    %33 = vector.load %arg2[%c1, %c0_7, %c0_8] : memref<3x4x32xbf16, #tpu.memory_space<vmem>>, vector<1x4x32xbf16>
    %34 = vector.shape_cast %33 : vector<1x4x32xbf16> to vector<4x32xbf16>
    %cst_9 = arith.constant dense<0.000000e+00> : vector<128x32xf32>
    %35 = tpu.matmul %32, %34, %cst_9 {dimension_numbers = #tpu.dot_dimension_numbers<[1], [0], [0], [1], [0, 0, 1, 1], [], []>} : vector<128x4xbf16>, vector<4x32xbf16>, vector<128x32xf32> -> vector<128x32xf32>
    %36 = arith.truncf %26 : vector<128x4xf32> to vector<128x4xbf16>
    %c0_10 = arith.constant 0 : index
    %c0_11 = arith.constant 0 : index
    %c0_12 = arith.constant 0 : index
    %37 = vector.load %arg2[%c0_10, %c0_11, %c0_12] : memref<3x4x32xbf16, #tpu.memory_space<vmem>>, vector<1x4x32xbf16>
    %38 = vector.shape_cast %37 : vector<1x4x32xbf16> to vector<4x32xbf16>
    %cst_13 = arith.constant dense<0.000000e+00> : vector<128x32xf32>
    %39 = tpu.matmul %36, %38, %cst_13 {dimension_numbers = #tpu.dot_dimension_numbers<[1], [0], [0], [1], [0, 0, 1, 1], [], []>} : vector<128x4xbf16>, vector<4x32xbf16>, vector<128x32xf32> -> vector<128x32xf32>
    %40 = arith.addf %35, %39 : vector<128x32xf32>
    %41 = arith.truncf %31 : vector<128x4xf32> to vector<128x4xbf16>
    %c2 = arith.constant 2 : index
    %c0_14 = arith.constant 0 : index
    %c0_15 = arith.constant 0 : index
    %42 = vector.load %arg2[%c2, %c0_14, %c0_15] : memref<3x4x32xbf16, #tpu.memory_space<vmem>>, vector<1x4x32xbf16>
    %43 = vector.shape_cast %42 : vector<1x4x32xbf16> to vector<4x32xbf16>
    %cst_16 = arith.constant dense<0.000000e+00> : vector<128x32xf32>
    %44 = tpu.matmul %41, %43, %cst_16 {dimension_numbers = #tpu.dot_dimension_numbers<[1], [0], [0], [1], [0, 0, 1, 1], [], []>} : vector<128x4xbf16>, vector<4x32xbf16>, vector<128x32xf32> -> vector<128x32xf32>
    %45 = arith.addf %40, %44 : vector<128x32xf32>
    %c0_17 = arith.constant 0 : index
    %c0_18 = arith.constant 0 : index
    %46 = vector.load %arg3[%c0_17, %c0_18] : memref<1x32xf32, #tpu.memory_space<vmem>>, vector<1x32xf32>
    %47 = vector.broadcast %46 : vector<1x32xf32> to vector<128x32xf32>
    %48 = arith.addf %45, %47 : vector<128x32xf32>
    %cst_19 = arith.constant 0.000000e+00 : f32
    %49 = vector.broadcast %cst_19 : f32 to vector<128x32xf32>
    %50 = arith.maximumf %48, %49 : vector<128x32xf32>
    %c1_i32_20 = arith.constant 1 : i32
    %51 = tpu.dynamic_rotate %50 by %c1_i32_20 dim 0 : vector<128x32xf32>, i32 -> vector<128x32xf32>
    %cst_21 = arith.constant 0.000000e+00 : f32
    %52 = vector.shape_cast %18 : vector<128x1xi1> to vector<128x1xi1>
    %53 = vector.broadcast %52 : vector<128x1xi1> to vector<128x32xi1>
    %54 = vector.broadcast %cst_21 : f32 to vector<128x32xf32>
    %55 = arith.select %53, %51, %54 : vector<128x32xi1>, vector<128x32xf32>
    %c127_i32_22 = arith.constant 127 : i32
    %56 = tpu.dynamic_rotate %50 by %c127_i32_22 dim 0 : vector<128x32xf32>, i32 -> vector<128x32xf32>
    %cst_23 = arith.constant 0.000000e+00 : f32
    %57 = vector.shape_cast %20 : vector<128x1xi1> to vector<128x1xi1>
    %58 = vector.broadcast %57 : vector<128x1xi1> to vector<128x32xi1>
    %59 = vector.broadcast %cst_23 : f32 to vector<128x32xf32>
    %60 = arith.select %58, %56, %59 : vector<128x32xi1>, vector<128x32xf32>
    %61 = arith.truncf %50 : vector<128x32xf32> to vector<128x32xbf16>
    %c1_24 = arith.constant 1 : index
    %c0_25 = arith.constant 0 : index
    %c0_26 = arith.constant 0 : index
    %62 = vector.load %arg4[%c1_24, %c0_25, %c0_26] : memref<3x32x16xbf16, #tpu.memory_space<vmem>>, vector<1x32x16xbf16>
    %63 = vector.shape_cast %62 : vector<1x32x16xbf16> to vector<32x16xbf16>
    %cst_27 = arith.constant dense<0.000000e+00> : vector<128x16xf32>
    %64 = tpu.matmul %61, %63, %cst_27 {dimension_numbers = #tpu.dot_dimension_numbers<[1], [0], [0], [1], [0, 0, 1, 1], [], []>} : vector<128x32xbf16>, vector<32x16xbf16>, vector<128x16xf32> -> vector<128x16xf32>
    %65 = arith.truncf %55 : vector<128x32xf32> to vector<128x32xbf16>
    %c0_28 = arith.constant 0 : index
    %c0_29 = arith.constant 0 : index
    %c0_30 = arith.constant 0 : index
    %66 = vector.load %arg4[%c0_28, %c0_29, %c0_30] : memref<3x32x16xbf16, #tpu.memory_space<vmem>>, vector<1x32x16xbf16>
    %67 = vector.shape_cast %66 : vector<1x32x16xbf16> to vector<32x16xbf16>
    %cst_31 = arith.constant dense<0.000000e+00> : vector<128x16xf32>
    %68 = tpu.matmul %65, %67, %cst_31 {dimension_numbers = #tpu.dot_dimension_numbers<[1], [0], [0], [1], [0, 0, 1, 1], [], []>} : vector<128x32xbf16>, vector<32x16xbf16>, vector<128x16xf32> -> vector<128x16xf32>
    %69 = arith.addf %64, %68 : vector<128x16xf32>
    %70 = arith.truncf %60 : vector<128x32xf32> to vector<128x32xbf16>
    %c2_32 = arith.constant 2 : index
    %c0_33 = arith.constant 0 : index
    %c0_34 = arith.constant 0 : index
    %71 = vector.load %arg4[%c2_32, %c0_33, %c0_34] : memref<3x32x16xbf16, #tpu.memory_space<vmem>>, vector<1x32x16xbf16>
    %72 = vector.shape_cast %71 : vector<1x32x16xbf16> to vector<32x16xbf16>
    %cst_35 = arith.constant dense<0.000000e+00> : vector<128x16xf32>
    %73 = tpu.matmul %70, %72, %cst_35 {dimension_numbers = #tpu.dot_dimension_numbers<[1], [0], [0], [1], [0, 0, 1, 1], [], []>} : vector<128x32xbf16>, vector<32x16xbf16>, vector<128x16xf32> -> vector<128x16xf32>
    %74 = arith.addf %69, %73 : vector<128x16xf32>
    %c0_36 = arith.constant 0 : index
    %c0_37 = arith.constant 0 : index
    %75 = vector.load %arg5[%c0_36, %c0_37] : memref<1x16xf32, #tpu.memory_space<vmem>>, vector<1x16xf32>
    %76 = vector.broadcast %75 : vector<1x16xf32> to vector<128x16xf32>
    %77 = arith.addf %74, %76 : vector<128x16xf32>
    %cst_38 = arith.constant 0.000000e+00 : f32
    %78 = vector.broadcast %cst_38 : f32 to vector<128x16xf32>
    %79 = arith.maximumf %77, %78 : vector<128x16xf32>
    %c0_39 = arith.constant 0 : index
    %c0_40 = arith.constant 0 : index
    %80 = vector.load %arg6[%c0_39, %c0_40] : memref<8x128xbf16, #tpu.memory_space<vmem>>, vector<8x128xbf16>
    %81 = arith.truncf %79 : vector<128x16xf32> to vector<128x16xbf16>
    %cst_41 = arith.constant dense<0.000000e+00> : vector<8x16xf32>
    %82 = tpu.matmul %80, %81, %cst_41 {dimension_numbers = #tpu.dot_dimension_numbers<[1], [0], [0], [1], [0, 0, 1, 1], [], []>} : vector<8x128xbf16>, vector<128x16xbf16>, vector<8x16xf32> -> vector<8x16xf32>
    %cst_42 = arith.constant 6.250000e-02 : f32
    %83 = vector.broadcast %cst_42 : f32 to vector<8x16xf32>
    %84 = arith.mulf %82, %83 : vector<8x16xf32>
    %85 = arith.truncf %84 : vector<8x16xf32> to vector<8x16xbf16>
    %c0_43 = arith.constant 0 : index
    %c0_44 = arith.constant 0 : index
    %86 = vector.load %arg7[%c0_43, %c0_44] : memref<16x128xbf16, #tpu.memory_space<vmem>>, vector<16x128xbf16>
    %cst_45 = arith.constant dense<0.000000e+00> : vector<8x128xf32>
    %87 = tpu.matmul %85, %86, %cst_45 {dimension_numbers = #tpu.dot_dimension_numbers<[1], [0], [0], [1], [0, 0, 1, 1], [], []>} : vector<8x16xbf16>, vector<16x128xbf16>, vector<8x128xf32> -> vector<8x128xf32>
    %c0_46 = arith.constant 0 : index
    %c0_47 = arith.constant 0 : index
    %88 = vector.load %arg8[%c0_46, %c0_47] : memref<1x128xf32, #tpu.memory_space<vmem>>, vector<1x128xf32>
    %89 = vector.broadcast %88 : vector<1x128xf32> to vector<8x128xf32>
    %90 = arith.addf %87, %89 : vector<8x128xf32>
    %c0_48 = arith.constant 0 : index
    %c0_49 = arith.constant 0 : index
    %91 = vector.load %arg9[%c0_48, %c0_49] : memref<8x128xf32, #tpu.memory_space<vmem>>, vector<8x128xf32>
    tpu.vector_store %arg9[%c0_48, %c0_49], %90 {strides = array<i32>} : memref<8x128xf32, #tpu.memory_space<vmem>>, vector<8x128xf32>,
    return
  }
  func.func @transform_0(%arg0: i32) -> (i32, i32) {
    %c0_i32 = arith.constant 0 : i32
    %c0_i32_0 = arith.constant 0 : i32
    return %arg0, %c0_i32 : i32, i32
  }
  func.func @transform_1(%arg0: i32) -> (i32, i32, i32) {
    %c0_i32 = arith.constant 0 : i32
    %c0_i32_0 = arith.constant 0 : i32
    %c0_i32_1 = arith.constant 0 : i32
    %c0_i32_2 = arith.constant 0 : i32
    return %c0_i32, %c0_i32_0, %c0_i32_1 : i32, i32, i32
  }
  func.func @transform_2(%arg0: i32) -> (i32, i32) {
    %c0_i32 = arith.constant 0 : i32
    %c0_i32_0 = arith.constant 0 : i32
    %c0_i32_1 = arith.constant 0 : i32
    return %c0_i32, %c0_i32_0 : i32, i32
  }
  func.func @transform_3(%arg0: i32) -> (i32, i32, i32) {
    %c0_i32 = arith.constant 0 : i32
    %c0_i32_0 = arith.constant 0 : i32
    %c0_i32_1 = arith.constant 0 : i32
    %c0_i32_2 = arith.constant 0 : i32
    return %c0_i32, %c0_i32_0, %c0_i32_1 : i32, i32, i32
  }
  func.func @transform_4(%arg0: i32) -> (i32, i32) {
    %c0_i32 = arith.constant 0 : i32
    %c0_i32_0 = arith.constant 0 : i32
    %c0_i32_1 = arith.constant 0 : i32
    return %c0_i32, %c0_i32_0 : i32, i32
  }
  func.func @transform_5(%arg0: i32) -> (i32, i32) {
    %c0_i32 = arith.constant 0 : i32
    %c0_i32_0 = arith.constant 0 : i32
    %c0_i32_1 = arith.constant 0 : i32
    return %c0_i32, %c0_i32_0 : i32, i32
  }
  func.func @transform_6(%arg0: i32) -> (i32, i32) {
    %c0_i32 = arith.constant 0 : i32
    %c0_i32_0 = arith.constant 0 : i32
    %c0_i32_1 = arith.constant 0 : i32
    return %c0_i32, %c0_i32_0 : i32, i32
  }
  func.func @transform_7(%arg0: i32) -> (i32, i32) {
    %c0_i32 = arith.constant 0 : i32
    %c0_i32_0 = arith.constant 0 : i32
    %c0_i32_1 = arith.constant 0 : i32
    return %c0_i32, %c0_i32_0 : i32, i32
  }
  func.func @transform_8(%arg0: i32) -> (i32, i32) {
    %c0_i32 = arith.constant 0 : i32
    %c0_i32_0 = arith.constant 0 : i32
    return %arg0, %c0_i32 : i32, i32
  }
}

</mosaic_0001>

<llo_original>
// kernel: prototype_cnn_forward.1
$region0: #{prototype_cnn_forward.1}
  #allocation0 [shape = 'u32[]', space=smem, size = 0x4, offset = 0x4, fixed_abs, tag = 'smem constant byte address 0x4 - core index']
  #allocation1 [shape = 'u32[144,128]{1,0:T(1,128)}', space=vmem, size = 0x12000, scoped, tag = 'internal scratch']
  %s0 = inlined_call_operand.vmem [shape: f32[256,4], index: 0, kind: input, shape index: {}]
  %s1 = inlined_call_operand.vmem [shape: bf16[3,4,32], index: 1, kind: input, shape index: {}]
  %s2 = inlined_call_operand.vmem [shape: f32[1,32], index: 2, kind: input, shape index: {}]
  %s3 = inlined_call_operand.vmem [shape: bf16[3,32,16], index: 3, kind: input, shape index: {}]
  %s4 = inlined_call_operand.vmem [shape: f32[1,16], index: 4, kind: input, shape index: {}]
  %s5 = inlined_call_operand.vmem [shape: bf16[8,128], index: 5, kind: input, shape index: {}]
  %s6 = inlined_call_operand.vmem [shape: bf16[16,128], index: 6, kind: input, shape index: {}]
  %s7 = inlined_call_operand.vmem [shape: f32[1,128], index: 7, kind: input, shape index: {}]
  %s8 = inlined_call_operand.vmem [shape: f32[16,128], index: 8, kind: output, shape index: {}]
  %s9 = sld [smem:[#allocation0]]
  $region65: #{prototype_cnn_forward.1} parent=0
    _
  %s11 = ssub.s32 1, %s9
  %s12 = scalar_select 0, %s11, %s9
  loop: start=0, step=1, limit=4
  $region2: #{prototype_cnn_forward.1} parent=0 // loop_pre_header
    _
  $region3: #{prototype_cnn_forward.1} parent=0 // loop_header
    %s14 = sphi 0, %s18
    %p15 = scmp.ge.s32.totalorder %s14, 4
    %s24 = sphi 0, %s26
    %s27 = sphi 0, %s24
    %s28 = sphi 0, %s27
    %s44 = sphi 0, %s28
    %s48 = sphi 0, %s48
    %s50 = sphi 0, %s48
    %s51 = sphi 0, %s50
    %s65 = sphi 0, %s51
    %s69 = sphi 0, %s69
    %s71 = sphi 0, %s69
    %s72 = sphi 0, %s71
    %s86 = sphi 0, %s72
    %s90 = sphi 0, %s90
    %s92 = sphi 0, %s90
    %s93 = sphi 0, %s92
    %s107 = sphi 0, %s93
    %s111 = sphi 0, %s111
    %s113 = sphi 0, %s111
    %s114 = sphi 0, %s113
    %s128 = sphi 0, %s114
    %s132 = sphi 0, %s132
    %s134 = sphi 0, %s132
    %s135 = sphi 0, %s134
    %s149 = sphi 0, %s135
    %s153 = sphi 0, %s153
    %s155 = sphi 0, %s153
    %s156 = sphi 0, %s155
    %s170 = sphi 0, %s156
    %s174 = sphi 0, %s174
    %s176 = sphi 0, %s174
    %s177 = sphi 0, %s176
    %s191 = sphi 0, %s177
    %s197 = sphi 0, %s199
    %s200 = sphi 0, %s197
    %s201 = sphi 0, %s200
    %s217 = sphi 0, %s201
  $region4: #{prototype_cnn_forward.1} parent=0 // loop_header_branch
    %17 = sbr.rel (%p15) target = $region8
  $region5: #{prototype_cnn_forward.1} parent=0 // loop_body
    %s19 = ssub.s32 %s14, 1
    %s20 = ssub.s32 %s14, 2
    %s21 = sadd.s32 %s14, 1
    %s22 = ssub.s32 %s14, %s21
    %p23 = scmp.eq.s32.totalorder %s22, 0
    %s25 = sadd.s32 %s24, 1
    %s26 = scalar_select %p23, %s24, %s25
    %p29 = pneg %p23
    %p30 = scmp.eq.s32.totalorder %s14, 1
    %p31 = por %p29, %p30
    %p32 = scmp.ne.s32.totalorder %s24, %s27
    %p33 = scmp.eq.s32.totalorder %s14, 0
    %p34 = por %p32, %p33
    %p35 = scmp.ne.s32.totalorder %s24, %s27
    %p36 = scmp.eq.s32.totalorder %s19, 1
    %p37 = por %p35, %p36
    %p38 = scmp.ne.s32.totalorder %s27, %s28
    %p39 = scmp.eq.s32.totalorder %s19, 0
    %p40 = por %p38, %p39
    %p41 = scmp.ne.s32.totalorder %s27, %s28
    %p42 = scmp.eq.s32.totalorder %s20, 1
    %p43 = por %p41, %p42
    %p45 = scmp.ne.s32.totalorder %s28, %s44
    %p46 = scmp.eq.s32.totalorder %s20, 0
    %p47 = por %p45, %p46
    %s49 = sadd.s32 %s48, 1
    %p52 = scmp.eq.s32.totalorder %s14, 1
    %p53 = scmp.ne.s32.totalorder %s48, %s50
    %p54 = scmp.eq.s32.totalorder %s14, 0
    %p55 = por %p53, %p54
    %p56 = scmp.ne.s32.totalorder %s48, %s50
    %p57 = scmp.eq.s32.totalorder %s19, 1
    %p58 = por %p56, %p57
    %p59 = scmp.ne.s32.totalorder %s50, %s51
    %p60 = scmp.eq.s32.totalorder %s19, 0
    %p61 = por %p59, %p60
    %p62 = scmp.ne.s32.totalorder %s50, %s51
    %p63 = scmp.eq.s32.totalorder %s20, 1
    %p64 = por %p62, %p63
    %p66 = scmp.ne.s32.totalorder %s51, %s65
    %p67 = scmp.eq.s32.totalorder %s20, 0
    %p68 = por %p66, %p67
    %s70 = sadd.s32 %s69, 1
    %p73 = scmp.eq.s32.totalorder %s14, 1
    %p74 = scmp.ne.s32.totalorder %s69, %s71
    %p75 = scmp.eq.s32.totalorder %s14, 0
    %p76 = por %p74, %p75
    %p77 = scmp.ne.s32.totalorder %s69, %s71
    %p78 = scmp.eq.s32.totalorder %s19, 1
    %p79 = por %p77, %p78
    %p80 = scmp.ne.s32.totalorder %s71, %s72
    %p81 = scmp.eq.s32.totalorder %s19, 0
    %p82 = por %p80, %p81
    %p83 = scmp.ne.s32.totalorder %s71, %s72
    %p84 = scmp.eq.s32.totalorder %s20, 1
    %p85 = por %p83, %p84
    %p87 = scmp.ne.s32.totalorder %s72, %s86
    %p88 = scmp.eq.s32.totalorder %s20, 0
    %p89 = por %p87, %p88
    %s91 = sadd.s32 %s90, 1
    %p94 = scmp.eq.s32.totalorder %s14, 1
    %p95 = scmp.ne.s32.totalorder %s90, %s92
    %p96 = scmp.eq.s32.totalorder %s14, 0
    %p97 = por %p95, %p96
    %p98 = scmp.ne.s32.totalorder %s90, %s92
    %p99 = scmp.eq.s32.totalorder %s19, 1
    %p100 = por %p98, %p99
    %p101 = scmp.ne.s32.totalorder %s92, %s93
    %p102 = scmp.eq.s32.totalorder %s19, 0
    %p103 = por %p101, %p102
    %p104 = scmp.ne.s32.totalorder %s92, %s93
    %p105 = scmp.eq.s32.totalorder %s20, 1
    %p106 = por %p104, %p105
    %p108 = scmp.ne.s32.totalorder %s93, %s107
    %p109 = scmp.eq.s32.totalorder %s20, 0
    %p110 = por %p108, %p109
    %s112 = sadd.s32 %s111, 1
    %p115 = scmp.eq.s32.totalorder %s14, 1
    %p116 = scmp.ne.s32.totalorder %s111, %s113
    %p117 = scmp.eq.s32.totalorder %s14, 0
    %p118 = por %p116, %p117
    %p119 = scmp.ne.s32.totalorder %s111, %s113
    %p120 = scmp.eq.s32.totalorder %s19, 1
    %p121 = por %p119, %p120
    %p122 = scmp.ne.s32.totalorder %s113, %s114
    %p123 = scmp.eq.s32.totalorder %s19, 0
    %p124 = por %p122, %p123
    %p125 = scmp.ne.s32.totalorder %s113, %s114
    %p126 = scmp.eq.s32.totalorder %s20, 1
    %p127 = por %p125, %p126
    %p129 = scmp.ne.s32.totalorder %s114, %s128
    %p130 = scmp.eq.s32.totalorder %s20, 0
    %p131 = por %p129, %p130
    %s133 = sadd.s32 %s132, 1
    %p136 = scmp.eq.s32.totalorder %s14, 1
    %p137 = scmp.ne.s32.totalorder %s132, %s134
    %p138 = scmp.eq.s32.totalorder %s14, 0
    %p139 = por %p137, %p138
    %p140 = scmp.ne.s32.totalorder %s132, %s134
    %p141 = scmp.eq.s32.totalorder %s19, 1
    %p142 = por %p140, %p141
    %p143 = scmp.ne.s32.totalorder %s134, %s135
    %p144 = scmp.eq.s32.totalorder %s19, 0
    %p145 = por %p143, %p144
    %p146 = scmp.ne.s32.totalorder %s134, %s135
    %p147 = scmp.eq.s32.totalorder %s20, 1
    %p148 = por %p146, %p147
    %p150 = scmp.ne.s32.totalorder %s135, %s149
    %p151 = scmp.eq.s32.totalorder %s20, 0
    %p152 = por %p150, %p151
    %s154 = sadd.s32 %s153, 1
    %p157 = scmp.eq.s32.totalorder %s14, 1
    %p158 = scmp.ne.s32.totalorder %s153, %s155
    %p159 = scmp.eq.s32.totalorder %s14, 0
    %p160 = por %p158, %p159
    %p161 = scmp.ne.s32.totalorder %s153, %s155
    %p162 = scmp.eq.s32.totalorder %s19, 1
    %p163 = por %p161, %p162
    %p164 = scmp.ne.s32.totalorder %s155, %s156
    %p165 = scmp.eq.s32.totalorder %s19, 0
    %p166 = por %p164, %p165
    %p167 = scmp.ne.s32.totalorder %s155, %s156
    %p168 = scmp.eq.s32.totalorder %s20, 1
    %p169 = por %p167, %p168
    %p171 = scmp.ne.s32.totalorder %s156, %s170
    %p172 = scmp.eq.s32.totalorder %s20, 0
    %p173 = por %p171, %p172
    %s175 = sadd.s32 %s174, 1
    %p178 = scmp.eq.s32.totalorder %s14, 1
    %p179 = scmp.ne.s32.totalorder %s174, %s176
    %p180 = scmp.eq.s32.totalorder %s14, 0
    %p181 = por %p179, %p180
    %p182 = scmp.ne.s32.totalorder %s174, %s176
    %p183 = scmp.eq.s32.totalorder %s19, 1
    %p184 = por %p182, %p183
    %p185 = scmp.ne.s32.totalorder %s176, %s177
    %p186 = scmp.eq.s32.totalorder %s19, 0
    %p187 = por %p185, %p186
    %p188 = scmp.ne.s32.totalorder %s176, %s177
    %p189 = scmp.eq.s32.totalorder %s20, 1
    %p190 = por %p188, %p189
    %p192 = scmp.ne.s32.totalorder %s177, %s191
    %p193 = scmp.eq.s32.totalorder %s20, 0
    %p194 = por %p192, %p193
    %s195 = ssub.s32 %s14, %s21
    %p196 = scmp.eq.s32.totalorder %s195, 0
    %s198 = sadd.s32 %s197, 1
    %s199 = scalar_select %p196, %s197, %s198
    %p202 = pneg %p196
    %p203 = scmp.eq.s32.totalorder %s14, 1
    %p204 = por %p202, %p203
    %p205 = scmp.ne.s32.totalorder %s197, %s200
    %p206 = scmp.eq.s32.totalorder %s14, 0
    %p207 = por %p205, %p206
    %p208 = scmp.ne.s32.totalorder %s197, %s200
    %p209 = scmp.eq.s32.totalorder %s19, 1
    %p210 = por %p208, %p209
    %p211 = scmp.ne.s32.totalorder %s200, %s201
    %p212 = scmp.eq.s32.totalorder %s19, 0
    %p213 = por %p211, %p212
    %p214 = scmp.ne.s32.totalorder %s200, %s201
    %p215 = scmp.eq.s32.totalorder %s20, 1
    %p216 = por %p214, %p215
    %p218 = scmp.ne.s32.totalorder %s201, %s217
    %p219 = scmp.eq.s32.totalorder %s20, 0
    %p220 = por %p218, %p219
    %p221 = scmp.le.s32.totalorder 1, %s14
    %p222 = scmp.lt.s32.totalorder %s14, 3
    %p223 = pnand %p221, %p222
    %p224 = pneg %p223
    // Predicated region
    $region9: #{prototype_cnn_forward.1} parent=5 // pred_check
      _
    $region10: #{prototype_cnn_forward.1} parent=5 // pred_check_branch
      %226 = sbr.rel (%p223) target = $region12
    $region11: #{prototype_cnn_forward.1} parent=5 // pred_region
      %s227 = ssub.s32 %s14, 1
      // Predicated region
      $region13: #{prototype_cnn_forward.1} parent=11 // pred_check
        %p228 = pneg %p61
      $region14: #{prototype_cnn_forward.1} parent=11 // pred_check_branch
        %230 = sbr.rel (%p228) target = $region16
      $region15: #{prototype_cnn_forward.1} parent=11 // pred_region
        _
      $region16: #{prototype_cnn_forward.1} parent=11 // pred_fallthru
        _
      // Predicated region
      $region17: #{prototype_cnn_forward.1} parent=11 // pred_check
        %p231 = pneg %p82
      $region18: #{prototype_cnn_forward.1} parent=11 // pred_check_branch
        %233 = sbr.rel (%p231) target = $region20
      $region19: #{prototype_cnn_forward.1} parent=11 // pred_region
        _
      $region20: #{prototype_cnn_forward.1} parent=11 // pred_fallthru
        _
      // Predicated region
      $region21: #{prototype_cnn_forward.1} parent=11 // pred_check
        %p234 = pneg %p103
      $region22: #{prototype_cnn_forward.1} parent=11 // pred_check_branch
        %236 = sbr.rel (%p234) target = $region24
      $region23: #{prototype_cnn_forward.1} parent=11 // pred_region
        _
      $region24: #{prototype_cnn_forward.1} parent=11 // pred_fallthru
        _
      // Predicated region
      $region25: #{prototype_cnn_forward.1} parent=11 // pred_check
        %p237 = pneg %p124
      $region26: #{prototype_cnn_forward.1} parent=11 // pred_check_branch
        %239 = sbr.rel (%p237) target = $region28
      $region27: #{prototype_cnn_forward.1} parent=11 // pred_region
        _
      $region28: #{prototype_cnn_forward.1} parent=11 // pred_fallthru
        _
      // Predicated region
      $region29: #{prototype_cnn_forward.1} parent=11 // pred_check
        %p240 = pneg %p145
      $region30: #{prototype_cnn_forward.1} parent=11 // pred_check_branch
        %242 = sbr.rel (%p240) target = $region32
      $region31: #{prototype_cnn_forward.1} parent=11 // pred_region
        _
      $region32: #{prototype_cnn_forward.1} parent=11 // pred_fallthru
        _
      // Predicated region
      $region33: #{prototype_cnn_forward.1} parent=11 // pred_check
        %p243 = pneg %p166
      $region34: #{prototype_cnn_forward.1} parent=11 // pred_check_branch
        %245 = sbr.rel (%p243) target = $region36
      $region35: #{prototype_cnn_forward.1} parent=11 // pred_region
        _
      $region36: #{prototype_cnn_forward.1} parent=11 // pred_fallthru
        _
      // Predicated region
      $region37: #{prototype_cnn_forward.1} parent=11 // pred_check
        %p246 = pneg %p187
      $region38: #{prototype_cnn_forward.1} parent=11 // pred_check_branch
        %248 = sbr.rel (%p246) target = $region40
      $region39: #{prototype_cnn_forward.1} parent=11 // pred_region
        _
      $region40: #{prototype_cnn_forward.1} parent=11 // pred_fallthru
        _
    $region12: #{prototype_cnn_forward.1} parent=5 // pred_fallthru
      _
    %p249 = scmp.lt.s32.totalorder %s14, 2
    // Predicated region
    $region41: #{prototype_cnn_forward.1} parent=5 // pred_check
      %p250 = pneg %p249
    $region42: #{prototype_cnn_forward.1} parent=5 // pred_check_branch
      %252 = sbr.rel (%p250) target = $region44
    $region43: #{prototype_cnn_forward.1} parent=5 // pred_region
      // Predicated region
      $region45: #{prototype_cnn_forward.1} parent=43 // pred_check
        %p253 = pneg %p34
      $region46: #{prototype_cnn_forward.1} parent=43 // pred_check_branch
        %255 = sbr.rel (%p253) target = $region48
      $region47: #{prototype_cnn_forward.1} parent=43 // pred_region
        %s256 = smul.u32 16, %s14
        %p257 = scmp.lt.s32.totalorder %s256, 31
        %s258 = scalar_select %p257, %s256, 31
        %s259 = smul.addr %s258, 8
        %s260 = scalar_lea.vmem %s0, %s259
        %s261 = smul.u32 16, %s14
      $region48: #{prototype_cnn_forward.1} parent=43 // pred_fallthru
        _
    $region44: #{prototype_cnn_forward.1} parent=5 // pred_fallthru
      _
    %p262 = scmp.le.s32.totalorder 1, %s14
    %p263 = scmp.lt.s32.totalorder %s14, 3
    %p264 = pnand %p262, %p263
    %p265 = pneg %p264
    // Predicated region
    $region49: #{prototype_cnn_forward.1} parent=5 // pred_check
      _
    $region50: #{prototype_cnn_forward.1} parent=5 // pred_check_branch
      %267 = sbr.rel (%p264) target = $region52
    $region51: #{prototype_cnn_forward.1} parent=5 // pred_region
      %s268 = ssub.s32 %s14, 1
      %s269 = smul.u32 16, %s19
      %p270 = scmp.lt.s32.totalorder %s269, 31
      %s271 = scalar_select %p270, %s269, 31
      %s272 = smul.addr %s271, 8
      %s273 = scalar_lea.vmem %s0, %s272
      %p274 = pneg %p40
      %p275 = pneg %p37
      %p276 = pneg %p61
      %p277 = pneg %p58
      %p278 = pneg %p82
      %p279 = pneg %p79
      %p280 = pneg %p103
      %p281 = pneg %p100
      %p282 = pneg %p124
      %p283 = pneg %p121
      %p284 = pneg %p145
      %p285 = pneg %p142
      %p286 = pneg %p166
      %p287 = pneg %p163
      %p288 = pneg %p187
      %p289 = pneg %p184
      %p290 = pneg %p213
      %p291 = pneg %p210
      %p292 = scmp.lt.s32.totalorder %s19, 1
      %s293 = scalar_select %p292, %s19, 1
      %s294 = smul.addr %s293, 8
      %s295 = scalar_lea.vmem %s8, %s294
      %s296 = smul.u32 16, %s19
      %p297 = scmp.lt.s32.totalorder %s296, 31
      %s298 = scalar_select %p297, %s296, 31
      %s299 = smul.addr %s298, 8
      %s300 = scalar_lea.vmem %s0, %s299
      %s301 = smul.u32 16, %s19
      %p302 = scmp.lt.s32.totalorder %s19, 1
      %s303 = scalar_select %p302, %s19, 1
      %s304 = smul.addr %s303, 8
      %s305 = scalar_lea.vmem %s8, %s304
      %v307 = vlaneseq
      %v308 = vshrl.u32 %v307, 7
      %v309 = vadd.s32 %v308, 8
      %v310 = vadd.s32 %v308, 16
      %v311 = vadd.s32 %v308, 24
      %v312 = vadd.s32 %v308, 32
      %v313 = vadd.s32 %v308, 40
      %v314 = vadd.s32 %v308, 48
      %v315 = vadd.s32 %v308, 56
      %v316 = vadd.s32 %v308, 64
      %v317 = vadd.s32 %v308, 72
      %v318 = vadd.s32 %v308, 80
      %v319 = vadd.s32 %v308, 88
      %v320 = vadd.s32 %v308, 96
      %v321 = vadd.s32 %v308, 104
      %v322 = vadd.s32 %v308, 112
      %v323 = vadd.s32 %v308, 120
      %vm324 = vcmp.lt.s32.totalorder %v308, 0
      %v325 = vsub.s32 0, %v308
      %v326 = vsel %vm324, %v325, %v308
      %v327 = vshrl.u32 %v326, 4
      %v328 = vand.u32 %v326, 15
      %v329 = vsub.s32 0, %v328
      %v330 = vsel %vm324, %v329, %v328
      %vm331 = vcmp.lt.s32.totalorder %v309, 0
      %v332 = vsub.s32 0, %v309
      %v333 = vsel %vm331, %v332, %v309
      %v334 = vshrl.u32 %v333, 4
      %v335 = vand.u32 %v333, 15
      %v336 = vsub.s32 0, %v335
      %v337 = vsel %vm331, %v336, %v335
      %vm338 = vcmp.lt.s32.totalorder %v310, 0
      %v339 = vsub.s32 0, %v310
      %v340 = vsel %vm338, %v339, %v310
      %v341 = vshrl.u32 %v340, 4
      %v342 = vand.u32 %v340, 15
      %v343 = vsub.s32 0, %v342
      %v344 = vsel %vm338, %v343, %v342
      %vm345 = vcmp.lt.s32.totalorder %v311, 0
      %v346 = vsub.s32 0, %v311
      %v347 = vsel %vm345, %v346, %v311
      %v348 = vshrl.u32 %v347, 4
      %v349 = vand.u32 %v347, 15
      %v350 = vsub.s32 0, %v349
      %v351 = vsel %vm345, %v350, %v349
      %vm352 = vcmp.lt.s32.totalorder %v312, 0
      %v353 = vsub.s32 0, %v312
      %v354 = vsel %vm352, %v353, %v312
      %v355 = vshrl.u32 %v354, 4
      %v356 = vand.u32 %v354, 15
      %v357 = vsub.s32 0, %v356
      %v358 = vsel %vm352, %v357, %v356
      %vm359 = vcmp.lt.s32.totalorder %v313, 0
      %v360 = vsub.s32 0, %v313
      %v361 = vsel %vm359, %v360, %v313
      %v362 = vshrl.u32 %v361, 4
      %v363 = vand.u32 %v361, 15
      %v364 = vsub.s32 0, %v363
      %v365 = vsel %vm359, %v364, %v363
      %vm366 = vcmp.lt.s32.totalorder %v314, 0
      %v367 = vsub.s32 0, %v314
      %v368 = vsel %vm366, %v367, %v314
      %v369 = vshrl.u32 %v368, 4
      %v370 = vand.u32 %v368, 15
      %v371 = vsub.s32 0, %v370
      %v372 = vsel %vm366, %v371, %v370
      %vm373 = vcmp.lt.s32.totalorder %v315, 0
      %v374 = vsub.s32 0, %v315
      %v375 = vsel %vm373, %v374, %v315
      %v376 = vshrl.u32 %v375, 4
      %v377 = vand.u32 %v375, 15
      %v378 = vsub.s32 0, %v377
      %v379 = vsel %vm373, %v378, %v377
      %vm380 = vcmp.lt.s32.totalorder %v316, 0
      %v381 = vsub.s32 0, %v316
      %v382 = vsel %vm380, %v381, %v316
      %v383 = vshrl.u32 %v382, 4
      %v384 = vand.u32 %v382, 15
      %v385 = vsub.s32 0, %v384
      %v386 = vsel %vm380, %v385, %v384
      %vm387 = vcmp.lt.s32.totalorder %v317, 0
      %v388 = vsub.s32 0, %v317
      %v389 = vsel %vm387, %v388, %v317
      %v390 = vshrl.u32 %v389, 4
      %v391 = vand.u32 %v389, 15
      %v392 = vsub.s32 0, %v391
      %v393 = vsel %vm387, %v392, %v391
      %vm394 = vcmp.lt.s32.totalorder %v318, 0
      %v395 = vsub.s32 0, %v318
      %v396 = vsel %vm394, %v395, %v318
      %v397 = vshrl.u32 %v396, 4
      %v398 = vand.u32 %v396, 15
      %v399 = vsub.s32 0, %v398
      %v400 = vsel %vm394, %v399, %v398
      %vm401 = vcmp.lt.s32.totalorder %v319, 0
      %v402 = vsub.s32 0, %v319
      %v403 = vsel %vm401, %v402, %v319
      %v404 = vshrl.u32 %v403, 4
      %v405 = vand.u32 %v403, 15
      %v406 = vsub.s32 0, %v405
      %v407 = vsel %vm401, %v406, %v405
      %vm408 = vcmp.lt.s32.totalorder %v320, 0
      %v409 = vsub.s32 0, %v320
      %v410 = vsel %vm408, %v409, %v320
      %v411 = vshrl.u32 %v410, 4
      %v412 = vand.u32 %v410, 15
      %v413 = vsub.s32 0, %v412
      %v414 = vsel %vm408, %v413, %v412
      %vm415 = vcmp.lt.s32.totalorder %v321, 0
      %v416 = vsub.s32 0, %v321
      %v417 = vsel %vm415, %v416, %v321
      %v418 = vshrl.u32 %v417, 4
      %v419 = vand.u32 %v417, 15
      %v420 = vsub.s32 0, %v419
      %v421 = vsel %vm415, %v420, %v419
      %vm422 = vcmp.lt.s32.totalorder %v322, 0
      %v423 = vsub.s32 0, %v322
      %v424 = vsel %vm422, %v423, %v322
      %v425 = vshrl.u32 %v424, 4
      %v426 = vand.u32 %v424, 15
      %v427 = vsub.s32 0, %v426
      %v428 = vsel %vm422, %v427, %v426
      %vm429 = vcmp.lt.s32.totalorder %v323, 0
      %v430 = vsub.s32 0, %v323
      %v431 = vsel %vm429, %v430, %v323
      %v432 = vshrl.u32 %v431, 4
      %v433 = vand.u32 %v431, 15
      %v434 = vsub.s32 0, %v433
      %v435 = vsel %vm429, %v434, %v433
      %vm436 = vcmp.ne.s32.totalorder %v330, 0
      %vm437 = vcmp.ne.s32.totalorder %v337, 0
      %vm438 = vcmp.ne.s32.totalorder %v344, 0
      %vm439 = vcmp.ne.s32.totalorder %v351, 0
      %vm440 = vcmp.ne.s32.totalorder %v358, 0
      %vm441 = vcmp.ne.s32.totalorder %v365, 0
      %vm442 = vcmp.ne.s32.totalorder %v372, 0
      %vm443 = vcmp.ne.s32.totalorder %v379, 0
      %vm444 = vcmp.ne.s32.totalorder %v386, 0
      %vm445 = vcmp.ne.s32.totalorder %v393, 0
      %vm446 = vcmp.ne.s32.totalorder %v400, 0
      %vm447 = vcmp.ne.s32.totalorder %v407, 0
      %vm448 = vcmp.ne.s32.totalorder %v414, 0
      %vm449 = vcmp.ne.s32.totalorder %v421, 0
      %vm450 = vcmp.ne.s32.totalorder %v428, 0
      %vm451 = vcmp.ne.s32.totalorder %v435, 0
      %vm452 = vcmp.lt.s32.totalorder %v330, 0
      %vm453 = vcmp.lt.s32.totalorder %v337, 0
      %vm454 = vcmp.lt.s32.totalorder %v344, 0
      %vm455 = vcmp.lt.s32.totalorder %v351, 0
      %vm456 = vcmp.lt.s32.totalorder %v358, 0
      %vm457 = vcmp.lt.s32.totalorder %v365, 0
      %vm458 = vcmp.lt.s32.totalorder %v372, 0
      %vm459 = vcmp.lt.s32.totalorder %v379, 0
      %vm460 = vcmp.lt.s32.totalorder %v386, 0
      %vm461 = vcmp.lt.s32.totalorder %v393, 0
      %vm462 = vcmp.lt.s32.totalorder %v400, 0
      %vm463 = vcmp.lt.s32.totalorder %v407, 0
      %vm464 = vcmp.lt.s32.totalorder %v414, 0
      %vm465 = vcmp.lt.s32.totalorder %v421, 0
      %vm466 = vcmp.lt.s32.totalorder %v428, 0
      %vm467 = vcmp.lt.s32.totalorder %v435, 0
      %vm468 = vmand %vm452, %vm436
      %vm469 = vmand %vm453, %vm437
      %vm470 = vmand %vm454, %vm438
      %vm471 = vmand %vm455, %vm439
      %vm472 = vmand %vm456, %vm440
      %vm473 = vmand %vm457, %vm441
      %vm474 = vmand %vm458, %vm442
      %vm475 = vmand %vm459, %vm443
      %vm476 = vmand %vm460, %vm444
      %vm477 = vmand %vm461, %vm445
      %vm478 = vmand %vm462, %vm446
      %vm479 = vmand %vm463, %vm447
      %vm480 = vmand %vm464, %vm448
      %vm481 = vmand %vm465, %vm449
      %vm482 = vmand %vm466, %vm450
      %vm483 = vmand %vm467, %vm451
      %v484 = vadd.s32 %v330, 16
      %v485 = vadd.s32 %v337, 16
      %v486 = vadd.s32 %v344, 16
      %v487 = vadd.s32 %v351, 16
      %v488 = vadd.s32 %v358, 16
      %v489 = vadd.s32 %v365, 16
      %v490 = vadd.s32 %v372, 16
      %v491 = vadd.s32 %v379, 16
      %v492 = vadd.s32 %v386, 16
      %v493 = vadd.s32 %v393, 16
      %v494 = vadd.s32 %v400, 16
      %v495 = vadd.s32 %v407, 16
      %v496 = vadd.s32 %v414, 16
      %v497 = vadd.s32 %v421, 16
      %v498 = vadd.s32 %v428, 16
      %v499 = vadd.s32 %v435, 16
      %v500 = vsel %vm468, %v484, %v330
      %v501 = vsel %vm469, %v485, %v337
      %v502 = vsel %vm470, %v486, %v344
      %v503 = vsel %vm471, %v487, %v351
      %v504 = vsel %vm472, %v488, %v358
      %v505 = vsel %vm473, %v489, %v365
      %v506 = vsel %vm474, %v490, %v372
      %v507 = vsel %vm475, %v491, %v379
      %v508 = vsel %vm476, %v492, %v386
      %v509 = vsel %vm477, %v493, %v393
      %v510 = vsel %vm478, %v494, %v400
      %v511 = vsel %vm479, %v495, %v407
      %v512 = vsel %vm480, %v496, %v414
      %v513 = vsel %vm481, %v497, %v421
      %v514 = vsel %vm482, %v498, %v428
      %v515 = vsel %vm483, %v499, %v435
      %vm516 = vcmp.ne.s32.totalorder %v500, 0
      %vm517 = vcmp.ne.s32.totalorder %v501, 0
      %vm518 = vcmp.ne.s32.totalorder %v502, 0
      %vm519 = vcmp.ne.s32.totalorder %v503, 0
      %vm520 = vcmp.ne.s32.totalorder %v504, 0
      %vm521 = vcmp.ne.s32.totalorder %v505, 0
      %vm522 = vcmp.ne.s32.totalorder %v506, 0
      %vm523 = vcmp.ne.s32.totalorder %v507, 0
      %vm524 = vcmp.ne.s32.totalorder %v508, 0
      %vm525 = vcmp.ne.s32.totalorder %v509, 0
      %vm526 = vcmp.ne.s32.totalorder %v510, 0
      %vm527 = vcmp.ne.s32.totalorder %v511, 0
      %vm528 = vcmp.ne.s32.totalorder %v512, 0
      %vm529 = vcmp.ne.s32.totalorder %v513, 0
      %vm530 = vcmp.ne.s32.totalorder %v514, 0
      %vm531 = vcmp.ne.s32.totalorder %v515, 0
      %vm532 = vcmp.ne.s32.totalorder %v500, 15
      %vm533 = vcmp.ne.s32.totalorder %v501, 15
      %vm534 = vcmp.ne.s32.totalorder %v502, 15
      %vm535 = vcmp.ne.s32.totalorder %v503, 15
      %vm536 = vcmp.ne.s32.totalorder %v504, 15
      %vm537 = vcmp.ne.s32.totalorder %v505, 15
      %vm538 = vcmp.ne.s32.totalorder %v506, 15
      %vm539 = vcmp.ne.s32.totalorder %v507, 15
      %vm540 = vcmp.ne.s32.totalorder %v508, 15
      %vm541 = vcmp.ne.s32.totalorder %v509, 15
      %vm542 = vcmp.ne.s32.totalorder %v510, 15
      %vm543 = vcmp.ne.s32.totalorder %v511, 15
      %vm544 = vcmp.ne.s32.totalorder %v512, 15
      %vm545 = vcmp.ne.s32.totalorder %v513, 15
      %vm546 = vcmp.ne.s32.totalorder %v514, 15
      %vm547 = vcmp.ne.s32.totalorder %v515, 15
      %v548 = vld [vmem:[%s300] sm:$0xff]
      %v549 = vld [vmem:[%s300 + $0x8] sm:$0xff]
      %v550 = vld [vmem:[%s300 + $0x10] sm:$0xff]
      %v551 = vld [vmem:[%s300 + $0x18] sm:$0xff]
      %v552 = vld [vmem:[%s300 + $0x20] sm:$0xff]
      %v553 = vld [vmem:[%s300 + $0x28] sm:$0xff]
      %v554 = vld [vmem:[%s300 + $0x30] sm:$0xff]
      %v555 = vld [vmem:[%s300 + $0x38] sm:$0xff]
      %v556 = vld [vmem:[%s300 + $0x40] sm:$0xff]
      %v557 = vld [vmem:[%s300 + $0x48] sm:$0xff]
      %v558 = vld [vmem:[%s300 + $0x50] sm:$0xff]
      %v559 = vld [vmem:[%s300 + $0x58] sm:$0xff]
      %v560 = vld [vmem:[%s300 + $0x60] sm:$0xff]
      %v561 = vld [vmem:[%s300 + $0x68] sm:$0xff]
      %v562 = vld [vmem:[%s300 + $0x70] sm:$0xff]
      %v563 = vld [vmem:[%s300 + $0x78] sm:$0xff]
      %v564 = vrot.slane %v548, 7
      %v565 = vrot.slane %v549, 7
      %v566 = vrot.slane %v550, 7
      %v567 = vrot.slane %v551, 7
      %v568 = vrot.slane %v552, 7
      %v569 = vrot.slane %v553, 7
      %v570 = vrot.slane %v554, 7
      %v571 = vrot.slane %v555, 7
      %v572 = vrot.slane %v556, 7
      %v573 = vrot.slane %v557, 7
      %v574 = vrot.slane %v558, 7
      %v575 = vrot.slane %v559, 7
      %v576 = vrot.slane %v560, 7
      %v577 = vrot.slane %v561, 7
      %v578 = vrot.slane %v562, 7
      %v579 = vrot.slane %v563, 7
      %vm580 = vcmp.lt.s32.totalorder %v308, 1
      %v581 = vsel %vm580, %v578, %v579
      %v582 = vsel %vm580, %v577, %v578
      %v583 = vsel %vm580, %v576, %v577
      %v584 = vsel %vm580, %v575, %v576
      %v585 = vsel %vm580, %v574, %v575
      %v586 = vsel %vm580, %v573, %v574
      %v587 = vsel %vm580, %v572, %v573
      %v588 = vsel %vm580, %v571, %v572
      %v589 = vsel %vm580, %v570, %v571
      %v590 = vsel %vm580, %v569, %v570
      %v591 = vsel %vm580, %v568, %v569
      %v592 = vsel %vm580, %v567, %v568
      %v593 = vsel %vm580, %v566, %v567
      %v594 = vsel %vm580, %v565, %v566
      %v595 = vsel %vm580, %v564, %v565
      %v596 = vsel %vm580, %v579, %v564
      %v597 = vsel %vm516, 1, 0
      %v598 = vsel %vm517, 1, 0
      %v599 = vsel %vm518, 1, 0
      %v600 = vsel %vm519, 1, 0
      %v601 = vsel %vm520, 1, 0
      %v602 = vsel %vm521, 1, 0
      %v603 = vsel %vm522, 1, 0
      %v604 = vsel %vm523, 1, 0
      %v605 = vsel %vm524, 1, 0
      %v606 = vsel %vm525, 1, 0
      %v607 = vsel %vm526, 1, 0
      %v608 = vsel %vm527, 1, 0
      %v609 = vsel %vm528, 1, 0
      %v610 = vsel %vm529, 1, 0
      %v611 = vsel %vm530, 1, 0
      %v612 = vsel %vm531, 1, 0
      %vm613 = vcmp.eq.s32.totalorder %v597, 1
      %vm614 = vcmp.eq.s32.totalorder %v598, 1
      %vm615 = vcmp.eq.s32.totalorder %v599, 1
      %vm616 = vcmp.eq.s32.totalorder %v600, 1
      %vm617 = vcmp.eq.s32.totalorder %v601, 1
      %vm618 = vcmp.eq.s32.totalorder %v602, 1
      %vm619 = vcmp.eq.s32.totalorder %v603, 1
      %vm620 = vcmp.eq.s32.totalorder %v604, 1
      %vm621 = vcmp.eq.s32.totalorder %v605, 1
      %vm622 = vcmp.eq.s32.totalorder %v606, 1
      %vm623 = vcmp.eq.s32.totalorder %v607, 1
      %vm624 = vcmp.eq.s32.totalorder %v608, 1
      %vm625 = vcmp.eq.s32.totalorder %v609, 1
      %vm626 = vcmp.eq.s32.totalorder %v610, 1
      %vm627 = vcmp.eq.s32.totalorder %v611, 1
      %vm628 = vcmp.eq.s32.totalorder %v612, 1
      %v629 = vsel %vm613, %v596, 0.0
      %v630 = vsel %vm614, %v595, 0.0
      %v631 = vsel %vm615, %v594, 0.0
      %v632 = vsel %vm616, %v593, 0.0
      %v633 = vsel %vm617, %v592, 0.0
      %v634 = vsel %vm618, %v591, 0.0
      %v635 = vsel %vm619, %v590, 0.0
      %v636 = vsel %vm620, %v589, 0.0
      %v637 = vsel %vm621, %v588, 0.0
      %v638 = vsel %vm622, %v587, 0.0
      %v639 = vsel %vm623, %v586, 0.0
      %v640 = vsel %vm624, %v585, 0.0
      %v641 = vsel %vm625, %v584, 0.0
      %v642 = vsel %vm626, %v583, 0.0
      %v643 = vsel %vm627, %v582, 0.0
      %v644 = vsel %vm628, %v581, 0.0
      %v645 = vrot.slane %v548, 1
      %v646 = vrot.slane %v549, 1
      %v647 = vrot.slane %v550, 1
      %v648 = vrot.slane %v551, 1
      %v649 = vrot.slane %v552, 1
      %v650 = vrot.slane %v553, 1
      %v651 = vrot.slane %v554, 1
      %v652 = vrot.slane %v555, 1
      %v653 = vrot.slane %v556, 1
      %v654 = vrot.slane %v557, 1
      %v655 = vrot.slane %v558, 1
      %v656 = vrot.slane %v559, 1
      %v657 = vrot.slane %v560, 1
      %v658 = vrot.slane %v561, 1
      %v659 = vrot.slane %v562, 1
      %v660 = vrot.slane %v563, 1
      %vm661 = vcmp.lt.s32.totalorder %v308, 7
      %v662 = vsel %vm661, %v659, %v660
      %v663 = vsel %vm661, %v658, %v659
      %v664 = vsel %vm661, %v657, %v658
      %v665 = vsel %vm661, %v656, %v657
      %v666 = vsel %vm661, %v655, %v656
      %v667 = vsel %vm661, %v654, %v655
      %v668 = vsel %vm661, %v653, %v654
      %v669 = vsel %vm661, %v652, %v653
      %v670 = vsel %vm661, %v651, %v652
      %v671 = vsel %vm661, %v650, %v651
      %v672 = vsel %vm661, %v649, %v650
      %v673 = vsel %vm661, %v648, %v649
      %v674 = vsel %vm661, %v647, %v648
      %v675 = vsel %vm661, %v646, %v647
      %v676 = vsel %vm661, %v645, %v646
      %v677 = vsel %vm661, %v660, %v645
      %v678 = vsel %vm532, 1, 0
      %v679 = vsel %vm533, 1, 0
      %v680 = vsel %vm534, 1, 0
      %v681 = vsel %vm535, 1, 0
      %v682 = vsel %vm536, 1, 0
      %v683 = vsel %vm537, 1, 0
      %v684 = vsel %vm538, 1, 0
      %v685 = vsel %vm539, 1, 0
      %v686 = vsel %vm540, 1, 0
      %v687 = vsel %vm541, 1, 0
      %v688 = vsel %vm542, 1, 0
      %v689 = vsel %vm543, 1, 0
      %v690 = vsel %vm544, 1, 0
      %v691 = vsel %vm545, 1, 0
      %v692 = vsel %vm546, 1, 0
      %v693 = vsel %vm547, 1, 0
      %vm694 = vcmp.eq.s32.totalorder %v678, 1
      %vm695 = vcmp.eq.s32.totalorder %v679, 1
      %vm696 = vcmp.eq.s32.totalorder %v680, 1
      %vm697 = vcmp.eq.s32.totalorder %v681, 1
      %vm698 = vcmp.eq.s32.totalorder %v682, 1
      %vm699 = vcmp.eq.s32.totalorder %v683, 1
      %vm700 = vcmp.eq.s32.totalorder %v684, 1
      %vm701 = vcmp.eq.s32.totalorder %v685, 1
      %vm702 = vcmp.eq.s32.totalorder %v686, 1
      %vm703 = vcmp.eq.s32.totalorder %v687, 1
      %vm704 = vcmp.eq.s32.totalorder %v688, 1
      %vm705 = vcmp.eq.s32.totalorder %v689, 1
      %vm706 = vcmp.eq.s32.totalorder %v690, 1
      %vm707 = vcmp.eq.s32.totalorder %v691, 1
      %vm708 = vcmp.eq.s32.totalorder %v692, 1
      %vm709 = vcmp.eq.s32.totalorder %v693, 1
      %v710 = vsel %vm694, %v676, 0.0
      %v711 = vsel %vm695, %v675, 0.0
      %v712 = vsel %vm696, %v674, 0.0
      %v713 = vsel %vm697, %v673, 0.0
      %v714 = vsel %vm698, %v672, 0.0
      %v715 = vsel %vm699, %v671, 0.0
      %v716 = vsel %vm700, %v670, 0.0
      %v717 = vsel %vm701, %v669, 0.0
      %v718 = vsel %vm702, %v668, 0.0
      %v719 = vsel %vm703, %v667, 0.0
      %v720 = vsel %vm704, %v666, 0.0
      %v721 = vsel %vm705, %v665, 0.0
      %v722 = vsel %vm706, %v664, 0.0
      %v723 = vsel %vm707, %v663, 0.0
      %v724 = vsel %vm708, %v662, 0.0
      %v725 = vsel %vm709, %v677, 0.0
      %v726 = vpack.c.bf16 %v549, %v548
      %v727 = vpack.c.bf16 %v551, %v550
      %v728 = vpack.c.bf16 %v553, %v552
      %v729 = vpack.c.bf16 %v555, %v554
      %v730 = vpack.c.bf16 %v557, %v556
      %v731 = vpack.c.bf16 %v559, %v558
      %v732 = vpack.c.bf16 %v561, %v560
      %v733 = vpack.c.bf16 %v563, %v562
      %s734 = scalar_lea.vmem %s1, 2
      %v735 = vld [vmem:[%s734] sm:$0x3]
      %v736 = vpack.c.bf16 %v630, %v629
      %v737 = vpack.c.bf16 %v632, %v631
      %v738 = vpack.c.bf16 %v634, %v633
      %v739 = vpack.c.bf16 %v636, %v635
      %v740 = vpack.c.bf16 %v638, %v637
      %v741 = vpack.c.bf16 %v640, %v639
      %v742 = vpack.c.bf16 %v642, %v641
      %v743 = vpack.c.bf16 %v644, %v643
      %v744 = vld [vmem:[%s1] sm:$0x3]
      %vm745 = vcmask 31744
      %v747 = vsel %vm745, %v736, 0
      %v750 = vsel %vm745, %v737, 0
      %v753 = vsel %vm745, %v738, 0
      %v756 = vsel %vm745, %v739, 0
      %v759 = vsel %vm745, %v740, 0
      %v762 = vsel %vm745, %v741, 0
      %v765 = vsel %vm745, %v742, 0
      %v768 = vsel %vm745, %v743, 0
      %vm770 = vcmask 1041408
      %v772 = vsel %vm770, %v744, 0
      %774 = vmatprep.subr.bf16.mxu0 0
      %775 = vmatpush1.bf16.msra.mxu0 %v772
      %776 = vmatprep.subr.bf16.mxu0 0
      %777 = vmatpush1.bf16.msra.mxu0 0
      %778 = vmatprep.subr.bf16.mxu0 0
      %779 = vmatpush1.bf16.msra.mxu0 0
      %780 = vmatprep.subr.bf16.mxu0 0
      %781 = vmatpush1.bf16.msra.mxu0 0
      %782 = vmatprep.subr.bf16.mxu0 0
      %783 = vmatpush1.bf16.msra.mxu0 0
      %784 = vmatprep.subr.bf16.mxu0 0
      %785 = vmatpush1.bf16.msra.mxu0 0
      %786 = vmatprep.subr.bf16.mxu0 0
      %787 = vmatpush1.bf16.msra.mxu0 0
      %788 = vmatprep.subr.bf16.mxu0 0
      %789 = vmatpush1.bf16.msra.mxu0 0
      %790 = vmatprep.subr.bf16.mxu0 0
      %791 = vmatpush1.bf16.msra.mxu0 0
      %792 = vmatprep.subr.bf16.mxu0 0
      %793 = vmatpush1.bf16.msra.mxu0 0
      %794 = vmatprep.subr.bf16.mxu0 0
      %795 = vmatpush1.bf16.msra.mxu0 0
      %796 = vmatprep.subr.bf16.mxu0 0
      %797 = vmatpush1.bf16.msra.mxu0 0
      %798 = vmatprep.subr.bf16.mxu0 0
      %799 = vmatpush1.bf16.msra.mxu0 0
      %800 = vmatprep.subr.bf16.mxu0 0
      %801 = vmatpush1.bf16.msra.mxu0 0
      %802 = vmatprep.subr.bf16.mxu0 0
      %803 = vmatpush1.bf16.msra.mxu0 0
      %804 = vmatprep.subr.bf16.mxu0 0
      %805 = vmatpush1.bf16.msra.mxu0 0
      %806 = vmatprep.mubr.bf16.mxu0 0
      %807 = vmatmul.mubr.bf16.gmra.mrb[0].mxu0 %v747
      %v808 = vpop.f32.mrb[0].mxu0
      %v809 = vadd.f32 0.0, %v808
      %v810 = vpop.f32.mrb[0].mxu0
      %v811 = vpop.f32.mrb[0].mxu0
      %v812 = vadd.f32 0.0, %v811
      %v813 = vpop.f32.mrb[0].mxu0
      %814 = vmatprep.mubr.bf16.mxu0 0
      %815 = vmatmul.mubr.bf16.gmra.mrb[0].mxu0 %v750
      %v816 = vpop.f32.mrb[0].mxu0
      %v817 = vadd.f32 0.0, %v816
      %v818 = vpop.f32.mrb[0].mxu0
      %v819 = vpop.f32.mrb[0].mxu0
      %v820 = vadd.f32 0.0, %v819
      %v821 = vpop.f32.mrb[0].mxu0
      %822 = vmatprep.mubr.bf16.mxu0 0
      %823 = vmatmul.mubr.bf16.gmra.mrb[0].mxu0 %v753
      %v824 = vpop.f32.mrb[0].mxu0
      %v825 = vadd.f32 0.0, %v824
      %v826 = vpop.f32.mrb[0].mxu0
      %v827 = vpop.f32.mrb[0].mxu0
      %v828 = vadd.f32 0.0, %v827
      %v829 = vpop.f32.mrb[0].mxu0
      %830 = vmatprep.mubr.bf16.mxu0 0
      %831 = vmatmul.mubr.bf16.gmra.mrb[0].mxu0 %v756
      %v832 = vpop.f32.mrb[0].mxu0
      %v833 = vadd.f32 0.0, %v832
      %v834 = vpop.f32.mrb[0].mxu0
      %v835 = vpop.f32.mrb[0].mxu0
      %v836 = vadd.f32 0.0, %v835
      %v837 = vpop.f32.mrb[0].mxu0
      %838 = vmatprep.mubr.bf16.mxu0 0
      %839 = vmatmul.mubr.bf16.gmra.mrb[0].mxu0 %v759
      %v840 = vpop.f32.mrb[0].mxu0
      %v841 = vadd.f32 0.0, %v840
      %v842 = vpop.f32.mrb[0].mxu0
      %v843 = vpop.f32.mrb[0].mxu0
      %v844 = vadd.f32 0.0, %v843
      %v845 = vpop.f32.mrb[0].mxu0
      %846 = vmatprep.mubr.bf16.mxu0 0
      %847 = vmatmul.mubr.bf16.gmra.mrb[0].mxu0 %v762
      %v848 = vpop.f32.mrb[0].mxu0
      %v849 = vadd.f32 0.0, %v848
      %v850 = vpop.f32.mrb[0].mxu0
      %v851 = vpop.f32.mrb[0].mxu0
      %v852 = vadd.f32 0.0, %v851
      %v853 = vpop.f32.mrb[0].mxu0
      %854 = vmatprep.mubr.bf16.mxu0 0
      %855 = vmatmul.mubr.bf16.gmra.mrb[0].mxu0 %v765
      %v856 = vpop.f32.mrb[0].mxu0
      %v857 = vadd.f32 0.0, %v856
      %v858 = vpop.f32.mrb[0].mxu0
      %v859 = vpop.f32.mrb[0].mxu0
      %v860 = vadd.f32 0.0, %v859
      %v861 = vpop.f32.mrb[0].mxu0
      %862 = vmatprep.mubr.bf16.mxu0 0
      %863 = vmatmul.mubr.bf16.gmra.mrb[0].mxu0 %v768
      %v864 = vpop.f32.mrb[0].mxu0
      %v865 = vadd.f32 0.0, %v864
      %v866 = vpop.f32.mrb[0].mxu0
      %v867 = vpop.f32.mrb[0].mxu0
      %v868 = vadd.f32 0.0, %v867
      %v869 = vpop.f32.mrb[0].mxu0
      %870 = vdwg.mxu0
      %v872 = vsel %vm745, %v726, 0
      %v875 = vsel %vm745, %v727, 0
      %v878 = vsel %vm745, %v728, 0
      %v881 = vsel %vm745, %v729, 0
      %v884 = vsel %vm745, %v730, 0
      %v887 = vsel %vm745, %v731, 0
      %v890 = vsel %vm745, %v732, 0
      %v893 = vsel %vm745, %v733, 0
      %v896 = vsel %vm770, %v735, 0
      %898 = vmatprep.subr.bf16.mxu0 0
      %899 = vmatpush1.bf16.msra.mxu0 %v896
      %900 = vmatprep.subr.bf16.mxu0 0
      %901 = vmatpush1.bf16.msra.mxu0 0
      %902 = vmatprep.subr.bf16.mxu0 0
      %903 = vmatpush1.bf16.msra.mxu0 0
      %904 = vmatprep.subr.bf16.mxu0 0
      %905 = vmatpush1.bf16.msra.mxu0 0
      %906 = vmatprep.subr.bf16.mxu0 0
      %907 = vmatpush1.bf16.msra.mxu0 0
      %908 = vmatprep.subr.bf16.mxu0 0
      %909 = vmatpush1.bf16.msra.mxu0 0
      %910 = vmatprep.subr.bf16.mxu0 0
      %911 = vmatpush1.bf16.msra.mxu0 0
      %912 = vmatprep.subr.bf16.mxu0 0
      %913 = vmatpush1.bf16.msra.mxu0 0
      %914 = vmatprep.subr.bf16.mxu0 0
      %915 = vmatpush1.bf16.msra.mxu0 0
      %916 = vmatprep.subr.bf16.mxu0 0
      %917 = vmatpush1.bf16.msra.mxu0 0
      %918 = vmatprep.subr.bf16.mxu0 0
      %919 = vmatpush1.bf16.msra.mxu0 0
      %920 = vmatprep.subr.bf16.mxu0 0
      %921 = vmatpush1.bf16.msra.mxu0 0
      %922 = vmatprep.subr.bf16.mxu0 0
      %923 = vmatpush1.bf16.msra.mxu0 0
      %924 = vmatprep.subr.bf16.mxu0 0
      %925 = vmatpush1.bf16.msra.mxu0 0
      %926 = vmatprep.subr.bf16.mxu0 0
      %927 = vmatpush1.bf16.msra.mxu0 0
      %928 = vmatprep.subr.bf16.mxu0 0
      %929 = vmatpush1.bf16.msra.mxu0 0
      %930 = vmatprep.mubr.bf16.mxu0 0
      %931 = vmatmul.mubr.bf16.gmra.mrb[0].mxu0 %v872
      %v932 = vpop.f32.mrb[0].mxu0
      %v933 = vadd.f32 %v809, %v932
      %v934 = vpop.f32.mrb[0].mxu0
      %v935 = vpop.f32.mrb[0].mxu0
      %v936 = vadd.f32 %v812, %v935
      %v937 = vpop.f32.mrb[0].mxu0
      %938 = vmatprep.mubr.bf16.mxu0 0
      %939 = vmatmul.mubr.bf16.gmra.mrb[0].mxu0 %v875
      %v940 = vpop.f32.mrb[0].mxu0
      %v941 = vadd.f32 %v817, %v940
      %v942 = vpop.f32.mrb[0].mxu0
      %v943 = vpop.f32.mrb[0].mxu0
      %v944 = vadd.f32 %v820, %v943
      %v945 = vpop.f32.mrb[0].mxu0
      %946 = vmatprep.mubr.bf16.mxu0 0
      %947 = vmatmul.mubr.bf16.gmra.mrb[0].mxu0 %v878
      %v948 = vpop.f32.mrb[0].mxu0
      %v949 = vadd.f32 %v825, %v948
      %v950 = vpop.f32.mrb[0].mxu0
      %v951 = vpop.f32.mrb[0].mxu0
      %v952 = vadd.f32 %v828, %v951
      %v953 = vpop.f32.mrb[0].mxu0
      %954 = vmatprep.mubr.bf16.mxu0 0
      %955 = vmatmul.mubr.bf16.gmra.mrb[0].mxu0 %v881
      %v956 = vpop.f32.mrb[0].mxu0
      %v957 = vadd.f32 %v833, %v956
      %v958 = vpop.f32.mrb[0].mxu0
      %v959 = vpop.f32.mrb[0].mxu0
      %v960 = vadd.f32 %v836, %v959
      %v961 = vpop.f32.mrb[0].mxu0
      %962 = vmatprep.mubr.bf16.mxu0 0
      %963 = vmatmul.mubr.bf16.gmra.mrb[0].mxu0 %v884
      %v964 = vpop.f32.mrb[0].mxu0
      %v965 = vadd.f32 %v841, %v964
      %v966 = vpop.f32.mrb[0].mxu0
      %v967 = vpop.f32.mrb[0].mxu0
      %v968 = vadd.f32 %v844, %v967
      %v969 = vpop.f32.mrb[0].mxu0
      %970 = vmatprep.mubr.bf16.mxu0 0
      %971 = vmatmul.mubr.bf16.gmra.mrb[0].mxu0 %v887
      %v972 = vpop.f32.mrb[0].mxu0
      %v973 = vadd.f32 %v849, %v972
      %v974 = vpop.f32.mrb[0].mxu0
      %v975 = vpop.f32.mrb[0].mxu0
      %v976 = vadd.f32 %v852, %v975
      %v977 = vpop.f32.mrb[0].mxu0
      %978 = vmatprep.mubr.bf16.mxu0 0
      %979 = vmatmul.mubr.bf16.gmra.mrb[0].mxu0 %v890
      %v980 = vpop.f32.mrb[0].mxu0
      %v981 = vadd.f32 %v857, %v980
      %v982 = vpop.f32.mrb[0].mxu0
      %v983 = vpop.f32.mrb[0].mxu0
      %v984 = vadd.f32 %v860, %v983
      %v985 = vpop.f32.mrb[0].mxu0
      %986 = vmatprep.mubr.bf16.mxu0 0
      %987 = vmatmul.mubr.bf16.gmra.mrb[0].mxu0 %v893
      %v988 = vpop.f32.mrb[0].mxu0
      %v989 = vadd.f32 %v865, %v988
      %v990 = vpop.f32.mrb[0].mxu0
      %v991 = vpop.f32.mrb[0].mxu0
      %v992 = vadd.f32 %v868, %v991
      %v993 = vpop.f32.mrb[0].mxu0
      %994 = vdwg.mxu0
      %v995 = vpack.c.bf16 %v711, %v710
      %v996 = vpack.c.bf16 %v713, %v712
      %v997 = vpack.c.bf16 %v715, %v714
      %v998 = vpack.c.bf16 %v717, %v716
      %v999 = vpack.c.bf16 %v719, %v718
      %v1000 = vpack.c.bf16 %v721, %v720
      %v1001 = vpack.c.bf16 %v723, %v722
      %v1002 = vpack.c.bf16 %v725, %v724
      %s1003 = scalar_lea.vmem %s1, 4
      %v1004 = vld [vmem:[%s1003] sm:$0x3]
      %v1006 = vsel %vm745, %v995, 0
      %v1009 = vsel %vm745, %v996, 0
      %v1012 = vsel %vm745, %v997, 0
      %v1015 = vsel %vm745, %v998, 0
      %v1018 = vsel %vm745, %v999, 0
      %v1021 = vsel %vm745, %v1000, 0
      %v1024 = vsel %vm745, %v1001, 0
      %v1027 = vsel %vm745, %v1002, 0
      %v1030 = vsel %vm770, %v1004, 0
      %1032 = vmatprep.subr.bf16.mxu0 0
      %1033 = vmatpush1.bf16.msra.mxu0 %v1030
      %1034 = vmatprep.subr.bf16.mxu0 0
      %1035 = vmatpush1.bf16.msra.mxu0 0
      %1036 = vmatprep.subr.bf16.mxu0 0
      %1037 = vmatpush1.bf16.msra.mxu0 0
      %1038 = vmatprep.subr.bf16.mxu0 0
      %1039 = vmatpush1.bf16.msra.mxu0 0
      %1040 = vmatprep.subr.bf16.mxu0 0
      %1041 = vmatpush1.bf16.msra.mxu0 0
      %1042 = vmatprep.subr.bf16.mxu0 0
      %1043 = vmatpush1.bf16.msra.mxu0 0
      %1044 = vmatprep.subr.bf16.mxu0 0
      %1045 = vmatpush1.bf16.msra.mxu0 0
      %1046 = vmatprep.subr.bf16.mxu0 0
      %1047 = vmatpush1.bf16.msra.mxu0 0
      %1048 = vmatprep.subr.bf16.mxu0 0
      %1049 = vmatpush1.bf16.msra.mxu0 0
      %1050 = vmatprep.subr.bf16.mxu0 0
      %1051 = vmatpush1.bf16.msra.mxu0 0
      %1052 = vmatprep.subr.bf16.mxu0 0
      %1053 = vmatpush1.bf16.msra.mxu0 0
      %1054 = vmatprep.subr.bf16.mxu0 0
      %1055 = vmatpush1.bf16.msra.mxu0 0
      %1056 = vmatprep.subr.bf16.mxu0 0
      %1057 = vmatpush1.bf16.msra.mxu0 0
      %1058 = vmatprep.subr.bf16.mxu0 0
      %1059 = vmatpush1.bf16.msra.mxu0 0
      %1060 = vmatprep.subr.bf16.mxu0 0
      %1061 = vmatpush1.bf16.msra.mxu0 0
      %1062 = vmatprep.subr.bf16.mxu0 0
      %1063 = vmatpush1.bf16.msra.mxu0 0
      %1064 = vmatprep.mubr.bf16.mxu0 0
      %1065 = vmatmul.mubr.bf16.gmra.mrb[0].mxu0 %v1006
      %v1066 = vpop.f32.mrb[0].mxu0
      %v1067 = vadd.f32 0.0, %v1066
      %v1068 = vpop.f32.mrb[0].mxu0
      %v1069 = vpop.f32.mrb[0].mxu0
      %v1070 = vadd.f32 0.0, %v1069
      %v1071 = vpop.f32.mrb[0].mxu0
      %1072 = vmatprep.mubr.bf16.mxu0 0
      %1073 = vmatmul.mubr.bf16.gmra.mrb[0].mxu0 %v1009
      %v1074 = vpop.f32.mrb[0].mxu0
      %v1075 = vadd.f32 0.0, %v1074
      %v1076 = vpop.f32.mrb[0].mxu0
      %v1077 = vpop.f32.mrb[0].mxu0
      %v1078 = vadd.f32 0.0, %v1077
      %v1079 = vpop.f32.mrb[0].mxu0
      %1080 = vmatprep.mubr.bf16.mxu0 0
      %1081 = vmatmul.mubr.bf16.gmra.mrb[0].mxu0 %v1012
      %v1082 = vpop.f32.mrb[0].mxu0
      %v1083 = vadd.f32 0.0, %v1082
      %v1084 = vpop.f32.mrb[0].mxu0
      %v1085 = vpop.f32.mrb[0].mxu0
      %v1086 = vadd.f32 0.0, %v1085
      %v1087 = vpop.f32.mrb[0].mxu0
      %1088 = vmatprep.mubr.bf16.mxu0 0
      %1089 = vmatmul.mubr.bf16.gmra.mrb[0].mxu0 %v1015
      %v1090 = vpop.f32.mrb[0].mxu0
      %v1091 = vadd.f32 0.0, %v1090
      %v1092 = vpop.f32.mrb[0].mxu0
      %v1093 = vpop.f32.mrb[0].mxu0
      %v1094 = vadd.f32 0.0, %v1093
      %v1095 = vpop.f32.mrb[0].mxu0
      %1096 = vmatprep.mubr.bf16.mxu0 0
      %1097 = vmatmul.mubr.bf16.gmra.mrb[0].mxu0 %v1018
      %v1098 = vpop.f32.mrb[0].mxu0
      %v1099 = vadd.f32 0.0, %v1098
      %v1100 = vpop.f32.mrb[0].mxu0
      %v1101 = vpop.f32.mrb[0].mxu0
      %v1102 = vadd.f32 0.0, %v1101
      %v1103 = vpop.f32.mrb[0].mxu0
      %1104 = vmatprep.mubr.bf16.mxu0 0
      %1105 = vmatmul.mubr.bf16.gmra.mrb[0].mxu0 %v1021
      %v1106 = vpop.f32.mrb[0].mxu0
      %v1107 = vadd.f32 0.0, %v1106
      %v1108 = vpop.f32.mrb[0].mxu0
      %v1109 = vpop.f32.mrb[0].mxu0
      %v1110 = vadd.f32 0.0, %v1109
      %v1111 = vpop.f32.mrb[0].mxu0
      %1112 = vmatprep.mubr.bf16.mxu0 0
      %1113 = vmatmul.mubr.bf16.gmra.mrb[0].mxu0 %v1024
      %v1114 = vpop.f32.mrb[0].mxu0
      %v1115 = vadd.f32 0.0, %v1114
      %v1116 = vpop.f32.mrb[0].mxu0
      %v1117 = vpop.f32.mrb[0].mxu0
      %v1118 = vadd.f32 0.0, %v1117
      %v1119 = vpop.f32.mrb[0].mxu0
      %1120 = vmatprep.mubr.bf16.mxu0 0
      %1121 = vmatmul.mubr.bf16.gmra.mrb[0].mxu0 %v1027
      %v1122 = vpop.f32.mrb[0].mxu0
      %v1123 = vadd.f32 0.0, %v1122
      %v1124 = vpop.f32.mrb[0].mxu0
      %v1125 = vpop.f32.mrb[0].mxu0
      %v1126 = vadd.f32 0.0, %v1125
      %v1127 = vpop.f32.mrb[0].mxu0
      %1128 = vdwg.mxu0
      %v1129 = vadd.f32 %v933, %v1067
      %v1130 = vadd.f32 %v936, %v1070
      %v1131 = vadd.f32 %v941, %v1075
      %v1132 = vadd.f32 %v944, %v1078
      %v1133 = vadd.f32 %v949, %v1083
      %v1134 = vadd.f32 %v952, %v1086
      %v1135 = vadd.f32 %v957, %v1091
      %v1136 = vadd.f32 %v960, %v1094
      %v1137 = vadd.f32 %v965, %v1099
      %v1138 = vadd.f32 %v968, %v1102
      %v1139 = vadd.f32 %v973, %v1107
      %v1140 = vadd.f32 %v976, %v1110
      %v1141 = vadd.f32 %v981, %v1115
      %v1142 = vadd.f32 %v984, %v1118
      %v1143 = vadd.f32 %v989, %v1123
      %v1144 = vadd.f32 %v992, %v1126
      %v1145 = vld [vmem:[%s2] sm:$0x1]
      %v1147 = vlaneseq
      %v1148 = vshrl.u32 %v1147, 7
      %v1149 = vsub.s32 0, %v1148
      %v1150 = vrot.slane %v1145, %v1149
      %v1152 = vadd.f32 %v1129, %v1150
      %v1153 = vadd.f32 %v1130, %v1150
      %v1154 = vadd.f32 %v1131, %v1150
      %v1155 = vadd.f32 %v1132, %v1150
      %v1156 = vadd.f32 %v1133, %v1150
      %v1157 = vadd.f32 %v1134, %v1150
      %v1158 = vadd.f32 %v1135, %v1150
      %v1159 = vadd.f32 %v1136, %v1150
      %v1160 = vadd.f32 %v1137, %v1150
      %v1161 = vadd.f32 %v1138, %v1150
      %v1162 = vadd.f32 %v1139, %v1150
      %v1163 = vadd.f32 %v1140, %v1150
      %v1164 = vadd.f32 %v1141, %v1150
      %v1165 = vadd.f32 %v1142, %v1150
      %v1166 = vadd.f32 %v1143, %v1150
      %v1167 = vadd.f32 %v1144, %v1150
      %v1168 = vmax.f32 %v1152, 0.0
      %v1169 = vmax.f32 %v1153, 0.0
      %v1170 = vmax.f32 %v1154, 0.0
      %v1171 = vmax.f32 %v1155, 0.0
      %v1172 = vmax.f32 %v1156, 0.0
      %v1173 = vmax.f32 %v1157, 0.0
      %v1174 = vmax.f32 %v1158, 0.0
      %v1175 = vmax.f32 %v1159, 0.0
      %v1176 = vmax.f32 %v1160, 0.0
      %v1177 = vmax.f32 %v1161, 0.0
      %v1178 = vmax.f32 %v1162, 0.0
      %v1179 = vmax.f32 %v1163, 0.0
      %v1180 = vmax.f32 %v1164, 0.0
      %v1181 = vmax.f32 %v1165, 0.0
      %v1182 = vmax.f32 %v1166, 0.0
      %v1183 = vmax.f32 %v1167, 0.0
      %v1184 = vrot.slane %v1168, 7
      %v1185 = vrot.slane %v1169, 7
      %v1186 = vrot.slane %v1170, 7
      %v1187 = vrot.slane %v1171, 7
      %v1188 = vrot.slane %v1172, 7
      %v1189 = vrot.slane %v1173, 7
      %v1190 = vrot.slane %v1174, 7
      %v1191 = vrot.slane %v1175, 7
      %v1192 = vrot.slane %v1176, 7
      %v1193 = vrot.slane %v1177, 7
      %v1194 = vrot.slane %v1178, 7
      %v1195 = vrot.slane %v1179, 7
      %v1196 = vrot.slane %v1180, 7
      %v1197 = vrot.slane %v1181, 7
      %v1198 = vrot.slane %v1182, 7
      %v1199 = vrot.slane %v1183, 7
      %v1200 = vsel %vm580, %v1198, %v1199
      %v1201 = vsel %vm580, %v1197, %v1198
      %v1202 = vsel %vm580, %v1196, %v1197
      %v1203 = vsel %vm580, %v1195, %v1196
      %v1204 = vsel %vm580, %v1194, %v1195
      %v1205 = vsel %vm580, %v1193, %v1194
      %v1206 = vsel %vm580, %v1192, %v1193
      %v1207 = vsel %vm580, %v1191, %v1192
      %v1208 = vsel %vm580, %v1190, %v1191
      %v1209 = vsel %vm580, %v1189, %v1190
      %v1210 = vsel %vm580, %v1188, %v1189
      %v1211 = vsel %vm580, %v1187, %v1188
      %v1212 = vsel %vm580, %v1186, %v1187
      %v1213 = vsel %vm580, %v1185, %v1186
      %v1214 = vsel %vm580, %v1184, %v1185
      %v1215 = vsel %vm580, %v1199, %v1184
      %v1216 = vsel %vm613, %v1215, 0.0
      %v1217 = vsel %vm614, %v1214, 0.0
      %v1218 = vsel %vm615, %v1213, 0.0
      %v1219 = vsel %vm616, %v1212, 0.0
      %v1220 = vsel %vm617, %v1211, 0.0
      %v1221 = vsel %vm618, %v1210, 0.0
      %v1222 = vsel %vm619, %v1209, 0.0
      %v1223 = vsel %vm620, %v1208, 0.0
      %v1224 = vsel %vm621, %v1207, 0.0
      %v1225 = vsel %vm622, %v1206, 0.0
      %v1226 = vsel %vm623, %v1205, 0.0
      %v1227 = vsel %vm624, %v1204, 0.0
      %v1228 = vsel %vm625, %v1203, 0.0
      %v1229 = vsel %vm626, %v1202, 0.0
      %v1230 = vsel %vm627, %v1201, 0.0
      %v1231 = vsel %vm628, %v1200, 0.0
      %v1232 = vrot.slane %v1168, 1
      %v1233 = vrot.slane %v1169, 1
      %v1234 = vrot.slane %v1170, 1
      %v1235 = vrot.slane %v1171, 1
      %v1236 = vrot.slane %v1172, 1
      %v1237 = vrot.slane %v1173, 1
      %v1238 = vrot.slane %v1174, 1
      %v1239 = vrot.slane %v1175, 1
      %v1240 = vrot.slane %v1176, 1
      %v1241 = vrot.slane %v1177, 1
      %v1242 = vrot.slane %v1178, 1
      %v1243 = vrot.slane %v1179, 1
      %v1244 = vrot.slane %v1180, 1
      %v1245 = vrot.slane %v1181, 1
      %v1246 = vrot.slane %v1182, 1
      %v1247 = vrot.slane %v1183, 1
      %v1248 = vsel %vm661, %v1246, %v1247
      %v1249 = vsel %vm661, %v1245, %v1246
      %v1250 = vsel %vm661, %v1244, %v1245
      %v1251 = vsel %vm661, %v1243, %v1244
      %v1252 = vsel %vm661, %v1242, %v1243
      %v1253 = vsel %vm661, %v1241, %v1242
      %v1254 = vsel %vm661, %v1240, %v1241
      %v1255 = vsel %vm661, %v1239, %v1240
      %v1256 = vsel %vm661, %v1238, %v1239
      %v1257 = vsel %vm661, %v1237, %v1238
      %v1258 = vsel %vm661, %v1236, %v1237
      %v1259 = vsel %vm661, %v1235, %v1236
      %v1260 = vsel %vm661, %v1234, %v1235
      %v1261 = vsel %vm661, %v1233, %v1234
      %v1262 = vsel %vm661, %v1232, %v1233
      %v1263 = vsel %vm661, %v1247, %v1232
      %v1264 = vsel %vm694, %v1262, 0.0
      %v1265 = vsel %vm695, %v1261, 0.0
      %v1266 = vsel %vm696, %v1260, 0.0
      %v1267 = vsel %vm697, %v1259, 0.0
      %v1268 = vsel %vm698, %v1258, 0.0
      %v1269 = vsel %vm699, %v1257, 0.0
      %v1270 = vsel %vm700, %v1256, 0.0
      %v1271 = vsel %vm701, %v1255, 0.0
      %v1272 = vsel %vm702, %v1254, 0.0
      %v1273 = vsel %vm703, %v1253, 0.0
      %v1274 = vsel %vm704, %v1252, 0.0
      %v1275 = vsel %vm705, %v1251, 0.0
      %v1276 = vsel %vm706, %v1250, 0.0
      %v1277 = vsel %vm707, %v1249, 0.0
      %v1278 = vsel %vm708, %v1248, 0.0
      %v1279 = vsel %vm709, %v1263, 0.0
      %v1280 = vpack.c.bf16 %v1169, %v1168
      %v1281 = vpack.c.bf16 %v1171, %v1170
      %v1282 = vpack.c.bf16 %v1173, %v1172
      %v1283 = vpack.c.bf16 %v1175, %v1174
      %v1284 = vpack.c.bf16 %v1177, %v1176
      %v1285 = vpack.c.bf16 %v1179, %v1178
      %v1286 = vpack.c.bf16 %v1181, %v1180
      %v1287 = vpack.c.bf16 %v1183, %v1182
      %s1288 = scalar_lea.vmem %s3, 16
      %v1289 = vld [vmem:[%s1288] sm:$0xf]
      %v1290 = vld [vmem:[%s1288 + $0x4] sm:$0xf]
      %v1291 = vld [vmem:[%s1288 + $0x8] sm:$0xf]
      %v1292 = vld [vmem:[%s1288 + $0xc] sm:$0xf]
      %v1293 = vpack.c.bf16 %v1217, %v1216
      %v1294 = vpack.c.bf16 %v1219, %v1218
      %v1295 = vpack.c.bf16 %v1221, %v1220
      %v1296 = vpack.c.bf16 %v1223, %v1222
      %v1297 = vpack.c.bf16 %v1225, %v1224
      %v1298 = vpack.c.bf16 %v1227, %v1226
      %v1299 = vpack.c.bf16 %v1229, %v1228
      %v1300 = vpack.c.bf16 %v1231, %v1230
      %v1301 = vld [vmem:[%s3] sm:$0xf]
      %v1302 = vld [vmem:[%s3 + $0x4] sm:$0xf]
      %v1303 = vld [vmem:[%s3 + $0x8] sm:$0xf]
      %v1304 = vld [vmem:[%s3 + $0xc] sm:$0xf]
      %v1309 = vunpack.c.l.b16 %v1301
      %v1310 = vunpack.c.l.b16 %v1302
      %v1311 = vunpack.c.l.b16 %v1303
      %v1312 = vunpack.c.l.b16 %v1304
      %v1313 = vpack.c.b16 %v1310, %v1309
      %v1314 = vpack.c.b16 %v1312, %v1311
      %vm1317 = vcmask 261120
      %v1319 = vsel %vm1317, %v1293, 0
      %v1322 = vsel %vm1317, %v1294, 0
      %v1325 = vsel %vm1317, %v1295, 0
      %v1328 = vsel %vm1317, %v1296, 0
      %v1331 = vsel %vm1317, %v1297, 0
      %v1334 = vsel %vm1317, %v1298, 0
      %v1337 = vsel %vm1317, %v1299, 0
      %v1340 = vsel %vm1317, %v1300, 0
      %1342 = vmatprep.subr.bf16.mxu0 0
      %1343 = vmatpush1.bf16.msra.mxu0 %v1313
      %1344 = vmatprep.subr.bf16.mxu0 0
      %1345 = vmatpush1.bf16.msra.mxu0 %v1314
      %1346 = vmatprep.subr.bf16.mxu0 0
      %1347 = vmatpush1.bf16.msra.mxu0 0
      %1348 = vmatprep.subr.bf16.mxu0 0
      %1349 = vmatpush1.bf16.msra.mxu0 0
      %1350 = vmatprep.subr.bf16.mxu0 0
      %1351 = vmatpush1.bf16.msra.mxu0 0
      %1352 = vmatprep.subr.bf16.mxu0 0
      %1353 = vmatpush1.bf16.msra.mxu0 0
      %1354 = vmatprep.subr.bf16.mxu0 0
      %1355 = vmatpush1.bf16.msra.mxu0 0
      %1356 = vmatprep.subr.bf16.mxu0 0
      %1357 = vmatpush1.bf16.msra.mxu0 0
      %1358 = vmatprep.subr.bf16.mxu0 0
      %1359 = vmatpush1.bf16.msra.mxu0 0
      %1360 = vmatprep.subr.bf16.mxu0 0
      %1361 = vmatpush1.bf16.msra.mxu0 0
      %1362 = vmatprep.subr.bf16.mxu0 0
      %1363 = vmatpush1.bf16.msra.mxu0 0
      %1364 = vmatprep.subr.bf16.mxu0 0
      %1365 = vmatpush1.bf16.msra.mxu0 0
      %1366 = vmatprep.subr.bf16.mxu0 0
      %1367 = vmatpush1.bf16.msra.mxu0 0
      %1368 = vmatprep.subr.bf16.mxu0 0
      %1369 = vmatpush1.bf16.msra.mxu0 0
      %1370 = vmatprep.subr.bf16.mxu0 0
      %1371 = vmatpush1.bf16.msra.mxu0 0
      %1372 = vmatprep.subr.bf16.mxu0 0
      %1373 = vmatpush1.bf16.msra.mxu0 0
      %1374 = vmatprep.mubr.bf16.mxu0 0
      %1375 = vmatmul.mubr.bf16.gmra.mrb[0].mxu0 %v1319
      %v1376 = vpop.f32.mrb[0].mxu0
      %v1377 = vadd.f32 0.0, %v1376
      %v1378 = vpop.f32.mrb[0].mxu0
      %v1379 = vpop.f32.mrb[0].mxu0
      %v1380 = vadd.f32 0.0, %v1379
      %v1381 = vpop.f32.mrb[0].mxu0
      %1382 = vmatprep.mubr.bf16.mxu0 0
      %1383 = vmatmul.mubr.bf16.gmra.mrb[0].mxu0 %v1322
      %v1384 = vpop.f32.mrb[0].mxu0
      %v1385 = vadd.f32 0.0, %v1384
      %v1386 = vpop.f32.mrb[0].mxu0
      %v1387 = vpop.f32.mrb[0].mxu0
      %v1388 = vadd.f32 0.0, %v1387
      %v1389 = vpop.f32.mrb[0].mxu0
      %1390 = vmatprep.mubr.bf16.mxu0 0
      %1391 = vmatmul.mubr.bf16.gmra.mrb[0].mxu0 %v1325
      %v1392 = vpop.f32.mrb[0].mxu0
      %v1393 = vadd.f32 0.0, %v1392
      %v1394 = vpop.f32.mrb[0].mxu0
      %v1395 = vpop.f32.mrb[0].mxu0
      %v1396 = vadd.f32 0.0, %v1395
      %v1397 = vpop.f32.mrb[0].mxu0
      %1398 = vmatprep.mubr.bf16.mxu0 0
      %1399 = vmatmul.mubr.bf16.gmra.mrb[0].mxu0 %v1328
      %v1400 = vpop.f32.mrb[0].mxu0
      %v1401 = vadd.f32 0.0, %v1400
      %v1402 = vpop.f32.mrb[0].mxu0
      %v1403 = vpop.f32.mrb[0].mxu0
      %v1404 = vadd.f32 0.0, %v1403
      %v1405 = vpop.f32.mrb[0].mxu0
      %1406 = vmatprep.mubr.bf16.mxu0 0
      %1407 = vmatmul.mubr.bf16.gmra.mrb[0].mxu0 %v1331
      %v1408 = vpop.f32.mrb[0].mxu0
      %v1409 = vadd.f32 0.0, %v1408
      %v1410 = vpop.f32.mrb[0].mxu0
      %v1411 = vpop.f32.mrb[0].mxu0
      %v1412 = vadd.f32 0.0, %v1411
      %v1413 = vpop.f32.mrb[0].mxu0
      %1414 = vmatprep.mubr.bf16.mxu0 0
      %1415 = vmatmul.mubr.bf16.gmra.mrb[0].mxu0 %v1334
      %v1416 = vpop.f32.mrb[0].mxu0
      %v1417 = vadd.f32 0.0, %v1416
      %v1418 = vpop.f32.mrb[0].mxu0
      %v1419 = vpop.f32.mrb[0].mxu0
      %v1420 = vadd.f32 0.0, %v1419
      %v1421 = vpop.f32.mrb[0].mxu0
      %1422 = vmatprep.mubr.bf16.mxu0 0
      %1423 = vmatmul.mubr.bf16.gmra.mrb[0].mxu0 %v1337
      %v1424 = vpop.f32.mrb[0].mxu0
      %v1425 = vadd.f32 0.0, %v1424
      %v1426 = vpop.f32.mrb[0].mxu0
      %v1427 = vpop.f32.mrb[0].mxu0
      %v1428 = vadd.f32 0.0, %v1427
      %v1429 = vpop.f32.mrb[0].mxu0
      %1430 = vmatprep.mubr.bf16.mxu0 0
      %1431 = vmatmul.mubr.bf16.gmra.mrb[0].mxu0 %v1340
      %v1432 = vpop.f32.mrb[0].mxu0
      %v1433 = vadd.f32 0.0, %v1432
      %v1434 = vpop.f32.mrb[0].mxu0
      %v1435 = vpop.f32.mrb[0].mxu0
      %v1436 = vadd.f32 0.0, %v1435
      %v1437 = vpop.f32.mrb[0].mxu0
      %1438 = vdwg.mxu0
      %v1443 = vunpack.c.l.b16 %v1289
      %v1444 = vunpack.c.l.b16 %v1290
      %v1445 = vunpack.c.l.b16 %v1291
      %v1446 = vunpack.c.l.b16 %v1292
      %v1447 = vpack.c.b16 %v1444, %v1443
      %v1448 = vpack.c.b16 %v1446, %v1445
      %v1452 = vsel %vm1317, %v1280, 0
      %v1455 = vsel %vm1317, %v1281, 0
      %v1458 = vsel %vm1317, %v1282, 0
      %v1461 = vsel %vm1317, %v1283, 0
      %v1464 = vsel %vm1317, %v1284, 0
      %v1467 = vsel %vm1317, %v1285, 0
      %v1470 = vsel %vm1317, %v1286, 0
      %v1473 = vsel %vm1317, %v1287, 0
      %1475 = vmatprep.subr.bf16.mxu0 0
      %1476 = vmatpush1.bf16.msra.mxu0 %v1447
      %1477 = vmatprep.subr.bf16.mxu0 0
      %1478 = vmatpush1.bf16.msra.mxu0 %v1448
      %1479 = vmatprep.subr.bf16.mxu0 0
      %1480 = vmatpush1.bf16.msra.mxu0 0
      %1481 = vmatprep.subr.bf16.mxu0 0
      %1482 = vmatpush1.bf16.msra.mxu0 0
      %1483 = vmatprep.subr.bf16.mxu0 0
      %1484 = vmatpush1.bf16.msra.mxu0 0
      %1485 = vmatprep.subr.bf16.mxu0 0
      %1486 = vmatpush1.bf16.msra.mxu0 0
      %1487 = vmatprep.subr.bf16.mxu0 0
      %1488 = vmatpush1.bf16.msra.mxu0 0
      %1489 = vmatprep.subr.bf16.mxu0 0
      %1490 = vmatpush1.bf16.msra.mxu0 0
      %1491 = vmatprep.subr.bf16.mxu0 0
      %1492 = vmatpush1.bf16.msra.mxu0 0
      %1493 = vmatprep.subr.bf16.mxu0 0
      %1494 = vmatpush1.bf16.msra.mxu0 0
      %1495 = vmatprep.subr.bf16.mxu0 0
      %1496 = vmatpush1.bf16.msra.mxu0 0
      %1497 = vmatprep.subr.bf16.mxu0 0
      %1498 = vmatpush1.bf16.msra.mxu0 0
      %1499 = vmatprep.subr.bf16.mxu0 0
      %1500 = vmatpush1.bf16.msra.mxu0 0
      %1501 = vmatprep.subr.bf16.mxu0 0
      %1502 = vmatpush1.bf16.msra.mxu0 0
      %1503 = vmatprep.subr.bf16.mxu0 0
      %1504 = vmatpush1.bf16.msra.mxu0 0
      %1505 = vmatprep.subr.bf16.mxu0 0
      %1506 = vmatpush1.bf16.msra.mxu0 0
      %1507 = vmatprep.mubr.bf16.mxu0 0
      %1508 = vmatmul.mubr.bf16.gmra.mrb[0].mxu0 %v1452
      %v1509 = vpop.f32.mrb[0].mxu0
      %v1510 = vadd.f32 %v1377, %v1509
      %v1511 = vpop.f32.mrb[0].mxu0
      %v1512 = vpop.f32.mrb[0].mxu0
      %v1513 = vadd.f32 %v1380, %v1512
      %v1514 = vpop.f32.mrb[0].mxu0
      %1515 = vmatprep.mubr.bf16.mxu0 0
      %1516 = vmatmul.mubr.bf16.gmra.mrb[0].mxu0 %v1455
      %v1517 = vpop.f32.mrb[0].mxu0
      %v1518 = vadd.f32 %v1385, %v1517
      %v1519 = vpop.f32.mrb[0].mxu0
      %v1520 = vpop.f32.mrb[0].mxu0
      %v1521 = vadd.f32 %v1388, %v1520
      %v1522 = vpop.f32.mrb[0].mxu0
      %1523 = vmatprep.mubr.bf16.mxu0 0
      %1524 = vmatmul.mubr.bf16.gmra.mrb[0].mxu0 %v1458
      %v1525 = vpop.f32.mrb[0].mxu0
      %v1526 = vadd.f32 %v1393, %v1525
      %v1527 = vpop.f32.mrb[0].mxu0
      %v1528 = vpop.f32.mrb[0].mxu0
      %v1529 = vadd.f32 %v1396, %v1528
      %v1530 = vpop.f32.mrb[0].mxu0
      %1531 = vmatprep.mubr.bf16.mxu0 0
      %1532 = vmatmul.mubr.bf16.gmra.mrb[0].mxu0 %v1461
      %v1533 = vpop.f32.mrb[0].mxu0
      %v1534 = vadd.f32 %v1401, %v1533
      %v1535 = vpop.f32.mrb[0].mxu0
      %v1536 = vpop.f32.mrb[0].mxu0
      %v1537 = vadd.f32 %v1404, %v1536
      %v1538 = vpop.f32.mrb[0].mxu0
      %1539 = vmatprep.mubr.bf16.mxu0 0
      %1540 = vmatmul.mubr.bf16.gmra.mrb[0].mxu0 %v1464
      %v1541 = vpop.f32.mrb[0].mxu0
      %v1542 = vadd.f32 %v1409, %v1541
      %v1543 = vpop.f32.mrb[0].mxu0
      %v1544 = vpop.f32.mrb[0].mxu0
      %v1545 = vadd.f32 %v1412, %v1544
      %v1546 = vpop.f32.mrb[0].mxu0
      %1547 = vmatprep.mubr.bf16.mxu0 0
      %1548 = vmatmul.mubr.bf16.gmra.mrb[0].mxu0 %v1467
      %v1549 = vpop.f32.mrb[0].mxu0
      %v1550 = vadd.f32 %v1417, %v1549
      %v1551 = vpop.f32.mrb[0].mxu0
      %v1552 = vpop.f32.mrb[0].mxu0
      %v1553 = vadd.f32 %v1420, %v1552
      %v1554 = vpop.f32.mrb[0].mxu0
      %1555 = vmatprep.mubr.bf16.mxu0 0
      %1556 = vmatmul.mubr.bf16.gmra.mrb[0].mxu0 %v1470
      %v1557 = vpop.f32.mrb[0].mxu0
      %v1558 = vadd.f32 %v1425, %v1557
      %v1559 = vpop.f32.mrb[0].mxu0
      %v1560 = vpop.f32.mrb[0].mxu0
      %v1561 = vadd.f32 %v1428, %v1560
      %v1562 = vpop.f32.mrb[0].mxu0
      %1563 = vmatprep.mubr.bf16.mxu0 0
      %1564 = vmatmul.mubr.bf16.gmra.mrb[0].mxu0 %v1473
      %v1565 = vpop.f32.mrb[0].mxu0
      %v1566 = vadd.f32 %v1433, %v1565
      %v1567 = vpop.f32.mrb[0].mxu0
      %v1568 = vpop.f32.mrb[0].mxu0
      %v1569 = vadd.f32 %v1436, %v1568
      %v1570 = vpop.f32.mrb[0].mxu0
      %1571 = vdwg.mxu0
      %v1572 = vpack.c.bf16 %v1265, %v1264
      %v1573 = vpack.c.bf16 %v1267, %v1266
      %v1574 = vpack.c.bf16 %v1269, %v1268
      %v1575 = vpack.c.bf16 %v1271, %v1270
      %v1576 = vpack.c.bf16 %v1273, %v1272
      %v1577 = vpack.c.bf16 %v1275, %v1274
      %v1578 = vpack.c.bf16 %v1277, %v1276
      %v1579 = vpack.c.bf16 %v1279, %v1278
      %s1580 = scalar_lea.vmem %s3, 32
      %v1581 = vld [vmem:[%s1580] sm:$0xf]
      %v1582 = vld [vmem:[%s1580 + $0x4] sm:$0xf]
      %v1583 = vld [vmem:[%s1580 + $0x8] sm:$0xf]
      %v1584 = vld [vmem:[%s1580 + $0xc] sm:$0xf]
      %v1589 = vunpack.c.l.b16 %v1581
      %v1590 = vunpack.c.l.b16 %v1582
      %v1591 = vunpack.c.l.b16 %v1583
      %v1592 = vunpack.c.l.b16 %v1584
      %v1593 = vpack.c.b16 %v1590, %v1589
      %v1594 = vpack.c.b16 %v1592, %v1591
      %v1598 = vsel %vm1317, %v1572, 0
      %v1601 = vsel %vm1317, %v1573, 0
      %v1604 = vsel %vm1317, %v1574, 0
      %v1607 = vsel %vm1317, %v1575, 0
      %v1610 = vsel %vm1317, %v1576, 0
      %v1613 = vsel %vm1317, %v1577, 0
      %v1616 = vsel %vm1317, %v1578, 0
      %v1619 = vsel %vm1317, %v1579, 0
      %1621 = vmatprep.subr.bf16.mxu0 0
      %1622 = vmatpush1.bf16.msra.mxu0 %v1593
      %1623 = vmatprep.subr.bf16.mxu0 0
      %1624 = vmatpush1.bf16.msra.mxu0 %v1594
      %1625 = vmatprep.subr.bf16.mxu0 0
      %1626 = vmatpush1.bf16.msra.mxu0 0
      %1627 = vmatprep.subr.bf16.mxu0 0
      %1628 = vmatpush1.bf16.msra.mxu0 0
      %1629 = vmatprep.subr.bf16.mxu0 0
      %1630 = vmatpush1.bf16.msra.mxu0 0
      %1631 = vmatprep.subr.bf16.mxu0 0
      %1632 = vmatpush1.bf16.msra.mxu0 0
      %1633 = vmatprep.subr.bf16.mxu0 0
      %1634 = vmatpush1.bf16.msra.mxu0 0
      %1635 = vmatprep.subr.bf16.mxu0 0
      %1636 = vmatpush1.bf16.msra.mxu0 0
      %1637 = vmatprep.subr.bf16.mxu0 0
      %1638 = vmatpush1.bf16.msra.mxu0 0
      %1639 = vmatprep.subr.bf16.mxu0 0
      %1640 = vmatpush1.bf16.msra.mxu0 0
      %1641 = vmatprep.subr.bf16.mxu0 0
      %1642 = vmatpush1.bf16.msra.mxu0 0
      %1643 = vmatprep.subr.bf16.mxu0 0
      %1644 = vmatpush1.bf16.msra.mxu0 0
      %1645 = vmatprep.subr.bf16.mxu0 0
      %1646 = vmatpush1.bf16.msra.mxu0 0
      %1647 = vmatprep.subr.bf16.mxu0 0
      %1648 = vmatpush1.bf16.msra.mxu0 0
      %1649 = vmatprep.subr.bf16.mxu0 0
      %1650 = vmatpush1.bf16.msra.mxu0 0
      %1651 = vmatprep.subr.bf16.mxu0 0
      %1652 = vmatpush1.bf16.msra.mxu0 0
      %1653 = vmatprep.mubr.bf16.mxu0 0
      %1654 = vmatmul.mubr.bf16.gmra.mrb[0].mxu0 %v1598
      %v1655 = vpop.f32.mrb[0].mxu0
      %v1656 = vadd.f32 0.0, %v1655
      %v1657 = vpop.f32.mrb[0].mxu0
      %v1658 = vpop.f32.mrb[0].mxu0
      %v1659 = vadd.f32 0.0, %v1658
      %v1660 = vpop.f32.mrb[0].mxu0
      %1661 = vmatprep.mubr.bf16.mxu0 0
      %1662 = vmatmul.mubr.bf16.gmra.mrb[0].mxu0 %v1601
      %v1663 = vpop.f32.mrb[0].mxu0
      %v1664 = vadd.f32 0.0, %v1663
      %v1665 = vpop.f32.mrb[0].mxu0
      %v1666 = vpop.f32.mrb[0].mxu0
      %v1667 = vadd.f32 0.0, %v1666
      %v1668 = vpop.f32.mrb[0].mxu0
      %1669 = vmatprep.mubr.bf16.mxu0 0
      %1670 = vmatmul.mubr.bf16.gmra.mrb[0].mxu0 %v1604
      %v1671 = vpop.f32.mrb[0].mxu0
      %v1672 = vadd.f32 0.0, %v1671
      %v1673 = vpop.f32.mrb[0].mxu0
      %v1674 = vpop.f32.mrb[0].mxu0
      %v1675 = vadd.f32 0.0, %v1674
      %v1676 = vpop.f32.mrb[0].mxu0
      %1677 = vmatprep.mubr.bf16.mxu0 0
      %1678 = vmatmul.mubr.bf16.gmra.mrb[0].mxu0 %v1607
      %v1679 = vpop.f32.mrb[0].mxu0
      %v1680 = vadd.f32 0.0, %v1679
      %v1681 = vpop.f32.mrb[0].mxu0
      %v1682 = vpop.f32.mrb[0].mxu0
      %v1683 = vadd.f32 0.0, %v1682
      %v1684 = vpop.f32.mrb[0].mxu0
      %1685 = vmatprep.mubr.bf16.mxu0 0
      %1686 = vmatmul.mubr.bf16.gmra.mrb[0].mxu0 %v1610
      %v1687 = vpop.f32.mrb[0].mxu0
      %v1688 = vadd.f32 0.0, %v1687
      %v1689 = vpop.f32.mrb[0].mxu0
      %v1690 = vpop.f32.mrb[0].mxu0
      %v1691 = vadd.f32 0.0, %v1690
      %v1692 = vpop.f32.mrb[0].mxu0
      %1693 = vmatprep.mubr.bf16.mxu0 0
      %1694 = vmatmul.mubr.bf16.gmra.mrb[0].mxu0 %v1613
      %v1695 = vpop.f32.mrb[0].mxu0
      %v1696 = vadd.f32 0.0, %v1695
      %v1697 = vpop.f32.mrb[0].mxu0
      %v1698 = vpop.f32.mrb[0].mxu0
      %v1699 = vadd.f32 0.0, %v1698
      %v1700 = vpop.f32.mrb[0].mxu0
      %1701 = vmatprep.mubr.bf16.mxu0 0
      %1702 = vmatmul.mubr.bf16.gmra.mrb[0].mxu0 %v1616
      %v1703 = vpop.f32.mrb[0].mxu0
      %v1704 = vadd.f32 0.0, %v1703
      %v1705 = vpop.f32.mrb[0].mxu0
      %v1706 = vpop.f32.mrb[0].mxu0
      %v1707 = vadd.f32 0.0, %v1706
      %v1708 = vpop.f32.mrb[0].mxu0
      %1709 = vmatprep.mubr.bf16.mxu0 0
      %1710 = vmatmul.mubr.bf16.gmra.mrb[0].mxu0 %v1619
      %v1711 = vpop.f32.mrb[0].mxu0
      %v1712 = vadd.f32 0.0, %v1711
      %v1713 = vpop.f32.mrb[0].mxu0
      %v1714 = vpop.f32.mrb[0].mxu0
      %v1715 = vadd.f32 0.0, %v1714
      %v1716 = vpop.f32.mrb[0].mxu0
      %1717 = vdwg.mxu0
      %v1718 = vadd.f32 %v1510, %v1656
      %v1719 = vadd.f32 %v1513, %v1659
      %v1720 = vadd.f32 %v1518, %v1664
      %v1721 = vadd.f32 %v1521, %v1667
      %v1722 = vadd.f32 %v1526, %v1672
      %v1723 = vadd.f32 %v1529, %v1675
      %v1724 = vadd.f32 %v1534, %v1680
      %v1725 = vadd.f32 %v1537, %v1683
      %v1726 = vadd.f32 %v1542, %v1688
      %v1727 = vadd.f32 %v1545, %v1691
      %v1728 = vadd.f32 %v1550, %v1696
      %v1729 = vadd.f32 %v1553, %v1699
      %v1730 = vadd.f32 %v1558, %v1704
      %v1731 = vadd.f32 %v1561, %v1707
      %v1732 = vadd.f32 %v1566, %v1712
      %v1733 = vadd.f32 %v1569, %v1715
      %v1734 = vld [vmem:[%s4] sm:$0x1]
      %v1736 = vlaneseq
      %v1737 = vshrl.u32 %v1736, 7
      %v1738 = vsub.s32 0, %v1737
      %v1739 = vrot.slane %v1734, %v1738
      %v1741 = vadd.f32 %v1718, %v1739
      %v1742 = vadd.f32 %v1719, %v1739
      %v1743 = vadd.f32 %v1720, %v1739
      %v1744 = vadd.f32 %v1721, %v1739
      %v1745 = vadd.f32 %v1722, %v1739
      %v1746 = vadd.f32 %v1723, %v1739
      %v1747 = vadd.f32 %v1724, %v1739
      %v1748 = vadd.f32 %v1725, %v1739
      %v1749 = vadd.f32 %v1726, %v1739
      %v1750 = vadd.f32 %v1727, %v1739
      %v1751 = vadd.f32 %v1728, %v1739
      %v1752 = vadd.f32 %v1729, %v1739
      %v1753 = vadd.f32 %v1730, %v1739
      %v1754 = vadd.f32 %v1731, %v1739
      %v1755 = vadd.f32 %v1732, %v1739
      %v1756 = vadd.f32 %v1733, %v1739
      %v1757 = vmax.f32 %v1741, 0.0
      %v1758 = vmax.f32 %v1742, 0.0
      %v1759 = vmax.f32 %v1743, 0.0
      %v1760 = vmax.f32 %v1744, 0.0
      %v1761 = vmax.f32 %v1745, 0.0
      %v1762 = vmax.f32 %v1746, 0.0
      %v1763 = vmax.f32 %v1747, 0.0
      %v1764 = vmax.f32 %v1748, 0.0
      %v1765 = vmax.f32 %v1749, 0.0
      %v1766 = vmax.f32 %v1750, 0.0
      %v1767 = vmax.f32 %v1751, 0.0
      %v1768 = vmax.f32 %v1752, 0.0
      %v1769 = vmax.f32 %v1753, 0.0
      %v1770 = vmax.f32 %v1754, 0.0
      %v1771 = vmax.f32 %v1755, 0.0
      %v1772 = vmax.f32 %v1756, 0.0
      %v1773 = vld [vmem:[%s5] sm:$0xf]
      %v1774 = vpack.c.bf16 %v1758, %v1757
      %v1775 = vpack.c.bf16 %v1760, %v1759
      %v1776 = vpack.c.bf16 %v1762, %v1761
      %v1777 = vpack.c.bf16 %v1764, %v1763
      %v1778 = vpack.c.bf16 %v1766, %v1765
      %v1779 = vpack.c.bf16 %v1768, %v1767
      %v1780 = vpack.c.bf16 %v1770, %v1769
      %v1781 = vpack.c.bf16 %v1772, %v1771
      %1782 = vmatprep.subr.bf16.mxu0 0
      %1783 = vmatpush1.bf16.msra.mxu0 %v1774
      %1784 = vmatprep.subr.bf16.mxu0 0
      %1785 = vmatpush1.bf16.msra.mxu0 %v1775
      %1786 = vmatprep.subr.bf16.mxu0 0
      %1787 = vmatpush1.bf16.msra.mxu0 %v1776
      %1788 = vmatprep.subr.bf16.mxu0 0
      %1789 = vmatpush1.bf16.msra.mxu0 %v1777
      %1790 = vmatprep.subr.bf16.mxu0 0
      %1791 = vmatpush1.bf16.msra.mxu0 %v1778
      %1792 = vmatprep.subr.bf16.mxu0 0
      %1793 = vmatpush1.bf16.msra.mxu0 %v1779
      %1794 = vmatprep.subr.bf16.mxu0 0
      %1795 = vmatpush1.bf16.msra.mxu0 %v1780
      %1796 = vmatprep.subr.bf16.mxu0 0
      %1797 = vmatpush1.bf16.msra.mxu0 %v1781
      %1798 = vmatprep.subr.bf16.mxu0 0
      %1799 = vmatpush1.bf16.msra.mxu0 0
      %1800 = vmatprep.subr.bf16.mxu0 0
      %1801 = vmatpush1.bf16.msra.mxu0 0
      %1802 = vmatprep.subr.bf16.mxu0 0
      %1803 = vmatpush1.bf16.msra.mxu0 0
      %1804 = vmatprep.subr.bf16.mxu0 0
      %1805 = vmatpush1.bf16.msra.mxu0 0
      %1806 = vmatprep.subr.bf16.mxu0 0
      %1807 = vmatpush1.bf16.msra.mxu0 0
      %1808 = vmatprep.subr.bf16.mxu0 0
      %1809 = vmatpush1.bf16.msra.mxu0 0
      %1810 = vmatprep.subr.bf16.mxu0 0
      %1811 = vmatpush1.bf16.msra.mxu0 0
      %1812 = vmatprep.subr.bf16.mxu0 0
      %1813 = vmatpush1.bf16.msra.mxu0 0
      %1814 = vmatprep.mubr.bf16.mxu0 0
      %1815 = vmatmul.mubr.bf16.gmra.mrb[0].mxu0 %v1773
      %v1816 = vpop.f32.mrb[0].mxu0
      %v1817 = vadd.f32 0.0, %v1816
      %v1818 = vpop.f32.mrb[0].mxu0
      %v1819 = vpop.f32.mrb[0].mxu0
      %v1820 = vpop.f32.mrb[0].mxu0
      %1821 = vdwg.mxu0
      %v1822 = vmul.f32 %v1817, 0.0625
      %v1823 = vpack.c.bf16 %v1822, %v1822
      %v1824 = vld [vmem:[%s6] sm:$0xf]
      %v1825 = vld [vmem:[%s6 + $0x4] sm:$0xf]
      %v1826 = vld [vmem:[%s7] sm:$0x1]
      %v1828 = vlaneseq
      %v1829 = vshrl.u32 %v1828, 7
      %v1830 = vsub.s32 0, %v1829
      %v1831 = vrot.slane %v1826, %v1830
      %v1835 = vunpack.c.l.b16 %v1824
      %v1836 = vunpack.c.l.b16 %v1825
      %v1837 = vpack.c.b16 %v1836, %v1835
      %vm1839 = vcmask 130048
      %v1841 = vsel %vm1839, %v1823, 0
      %1843 = vmatprep.subr.bf16.mxu0 0
      %1844 = vmatpush1.bf16.msra.mxu0 %v1837
      %1845 = vmatprep.subr.bf16.mxu0 0
      %1846 = vmatpush1.bf16.msra.mxu0 0
      %1847 = vmatprep.subr.bf16.mxu0 0
      %1848 = vmatpush1.bf16.msra.mxu0 0
      %1849 = vmatprep.subr.bf16.mxu0 0
      %1850 = vmatpush1.bf16.msra.mxu0 0
      %1851 = vmatprep.subr.bf16.mxu0 0
      %1852 = vmatpush1.bf16.msra.mxu0 0
      %1853 = vmatprep.subr.bf16.mxu0 0
      %1854 = vmatpush1.bf16.msra.mxu0 0
      %1855 = vmatprep.subr.bf16.mxu0 0
      %1856 = vmatpush1.bf16.msra.mxu0 0
      %1857 = vmatprep.subr.bf16.mxu0 0
      %1858 = vmatpush1.bf16.msra.mxu0 0
      %1859 = vmatprep.subr.bf16.mxu0 0
      %1860 = vmatpush1.bf16.msra.mxu0 0
      %1861 = vmatprep.subr.bf16.mxu0 0
      %1862 = vmatpush1.bf16.msra.mxu0 0
      %1863 = vmatprep.subr.bf16.mxu0 0
      %1864 = vmatpush1.bf16.msra.mxu0 0
      %1865 = vmatprep.subr.bf16.mxu0 0
      %1866 = vmatpush1.bf16.msra.mxu0 0
      %1867 = vmatprep.subr.bf16.mxu0 0
      %1868 = vmatpush1.bf16.msra.mxu0 0
      %1869 = vmatprep.subr.bf16.mxu0 0
      %1870 = vmatpush1.bf16.msra.mxu0 0
      %1871 = vmatprep.subr.bf16.mxu0 0
      %1872 = vmatpush1.bf16.msra.mxu0 0
      %1873 = vmatprep.subr.bf16.mxu0 0
      %1874 = vmatpush1.bf16.msra.mxu0 0
      %1875 = vmatprep.mubr.bf16.mxu0 0
      %1876 = vmatmul.mubr.bf16.gmra.mrb[0].mxu0 %v1841
      %v1877 = vpop.f32.mrb[0].mxu0
      %v1878 = vadd.f32 %v1831, %v1877
      %v1879 = vpop.f32.mrb[0].mxu0
      %v1880 = vpop.f32.mrb[0].mxu0
      %v1881 = vpop.f32.mrb[0].mxu0
      %1882 = vdwg.mxu0
      %1883 = vst [vmem:[%s305] sm:$0xff] %v1878
      %p1884 = scmp.lt.s32.totalorder %s19, 1
      %s1885 = scalar_select %p1884, %s19, 1
      %s1886 = smul.addr %s1885, 8
      %s1887 = scalar_lea.vmem %s8, %s1886
      // Predicated region
      $region53: #{prototype_cnn_forward.1} parent=51 // pred_check
        %p1888 = pneg %p210
      $region54: #{prototype_cnn_forward.1} parent=51 // pred_check_branch
        %1890 = sbr.rel (%p1888) target = $region56
      $region55: #{prototype_cnn_forward.1} parent=51 // pred_region
        _
      $region56: #{prototype_cnn_forward.1} parent=51 // pred_fallthru
        _
    $region52: #{prototype_cnn_forward.1} parent=5 // pred_fallthru
      _
    %p1891 = scmp.le.s32.totalorder 2, %s14
    // Predicated region
    $region57: #{prototype_cnn_forward.1} parent=5 // pred_check
      %p1892 = pneg %p1891
    $region58: #{prototype_cnn_forward.1} parent=5 // pred_check_branch
      %1894 = sbr.rel (%p1892) target = $region60
    $region59: #{prototype_cnn_forward.1} parent=5 // pred_region
      %s1895 = ssub.s32 %s14, 2
      // Predicated region
      $region61: #{prototype_cnn_forward.1} parent=59 // pred_check
        %p1896 = pneg %p216
      $region62: #{prototype_cnn_forward.1} parent=59 // pred_check_branch
        %1898 = sbr.rel (%p1896) target = $region64
      $region63: #{prototype_cnn_forward.1} parent=59 // pred_region
        %p1899 = scmp.lt.s32.totalorder %s20, 1
        %s1900 = scalar_select %p1899, %s20, 1
        %s1901 = smul.addr %s1900, 8
        %s1902 = scalar_lea.vmem %s8, %s1901
      $region64: #{prototype_cnn_forward.1} parent=59 // pred_fallthru
        _
    $region60: #{prototype_cnn_forward.1} parent=5 // pred_fallthru
      _
  $region6: #{prototype_cnn_forward.1} parent=0 // loop_footer
    %s18 = sadd.s32 1, %s14
  $region7: #{prototype_cnn_forward.1} parent=0 // loop_footer_branch
    %13 = sbr.rel target = $region3
  $region8: #{prototype_cnn_forward.1} parent=0 // loop_exit
    _

</llo_original>
